<compile_context>
chip_gen: v7x
topology: tpu7x:2x2x1
jax: 0.10.0
libtpu: 0.0.40
codegen_flags: <defaults>
</compile_context>

<pallas_src>
import jax
import jax.numpy as jnp
from jax import lax
from jax.experimental import pallas as pl
from jax.experimental.pallas import tpu as pltpu


def fusion_enc_kernel(x1_ref, x2_ref, x3_ref,
                      w1_ref, b1_ref, w2_ref, b2_ref, w3_ref, b3_ref,
                      o_ref):
    """One batch tile: y = fc3( fc2( fc1(x1) + x2 ) + x3 ).

    Weights are in [out, in] layout; dot_general contracts the feature axis of
    the activations against the 'in' axis of the weights (trans_b semantics),
    so the MXU consumes them directly without any transpose.
    """
    compute_dtype = w1_ref.dtype                     # bf16 fast path if weights are bf16
    dn = (((1,), (1,)), ((), ()))                    # contract x[:, k] with w[:, k]

    def linear(h_f32, w_ref, b_ref):
        acc = lax.dot_general(h_f32.astype(compute_dtype), w_ref[...], dn,
                              preferred_element_type=jnp.float32)
        return acc + b_ref[...]                      # bias add in f32

    x1 = x1_ref[...].astype(jnp.float32)
    x2 = x2_ref[...].astype(jnp.float32)
    x3 = x3_ref[...].astype(jnp.float32)

    h = linear(x1, w1_ref, b1_ref) + x2              # fc1(x1) + x2   (f32)
    h = linear(h, w2_ref, b2_ref) + x3               # fc2(.) + x3    (f32)
    h = linear(h, w3_ref, b3_ref)                    # fc3(.)         (f32)

    o_ref[...] = h.astype(o_ref.dtype)


def fusion_layer_enc(x1, x2, x3, params, *, block_rows=256, compute_dtype=None):
    """params: dict with w1,b1,w2,b2,w3,b3 in PyTorch convention (w: [out, in]).

    compute_dtype: storage/compute dtype for the matmul operands (e.g.
    jnp.bfloat16 for the fast MXU path). Accumulation stays f32.
    """
    B, D = x1.shape
    if compute_dtype is None:
        compute_dtype = x1.dtype

    # Weights stay [out, in] -- only an (optional) dtype cast, never a transpose.
    w1 = params["w1"].astype(compute_dtype)
    w2 = params["w2"].astype(compute_dtype)
    w3 = params["w3"].astype(compute_dtype)
    # Biases kept in f32 (2-D row so the lane axis is the feature dim).
    b1 = params["b1"].reshape(1, D).astype(jnp.float32)
    b2 = params["b2"].reshape(1, D).astype(jnp.float32)
    b3 = params["b3"].reshape(1, D).astype(jnp.float32)

    # Batch tile: pipelined across the grid; fall back to the full batch if it
    # does not divide evenly (tiny/demo sizes).
    tm = block_rows if (B % block_rows == 0) else B
    grid = (B // tm,)

    row_spec = pl.BlockSpec((tm, D), lambda i: (i, 0))   # x1/x2/x3/out tiles
    w_spec = pl.BlockSpec((D, D), lambda i: (0, 0))      # resident across batch tiles
    b_spec = pl.BlockSpec((1, D), lambda i: (0, 0))      # resident across batch tiles

    return pl.pallas_call(
        fusion_enc_kernel,
        out_shape=jax.ShapeDtypeStruct((B, D), x1.dtype),
        grid=grid,
        in_specs=[
            row_spec, row_spec, row_spec,
            w_spec, b_spec,
            w_spec, b_spec,
            w_spec, b_spec,
        ],
        out_specs=row_spec,
        compiler_params=pltpu.CompilerParams(
            # Batch tiles are independent -> megacore sharding on v7x,
            # harmless on v5e/v6e (single TC).
            dimension_semantics=("parallel",),
        ),
    )(x1, x2, x3, w1, b1, w2, b2, w3, b3)


def reference(x1, x2, x3, params):
    h = x1 @ params["w1"].T + params["b1"]
    h = h + x2
    h = h @ params["w2"].T + params["b2"]
    h = h + x3
    h = h @ params["w3"].T + params["b3"]
    return h


if __name__ == "__main__":
    key = jax.random.PRNGKey(0)
    # Lane-dense feature dim (multiple of 128) and enough rows to exercise the
    # batch-tiled grid (two tiles of 256 rows).
    B, D = 512, 128

    keys = jax.random.split(key, 9)
    x1 = jax.random.normal(keys[0], (B, D), jnp.float32)
    x2 = jax.random.normal(keys[1], (B, D), jnp.float32)
    x3 = jax.random.normal(keys[2], (B, D), jnp.float32)

    # Deterministic parameter init (uniform like PyTorch Linear default scale).
    bound = 1.0 / (D ** 0.5)
    params = {
        "w1": jax.random.uniform(keys[3], (D, D), jnp.float32, -bound, bound),
        "b1": jax.random.uniform(keys[4], (D,), jnp.float32, -bound, bound),
        "w2": jax.random.uniform(keys[5], (D, D), jnp.float32, -bound, bound),
        "b2": jax.random.uniform(keys[6], (D,), jnp.float32, -bound, bound),
        "w3": jax.random.uniform(keys[7], (D, D), jnp.float32, -bound, bound),
        "b3": jax.random.uniform(keys[8], (D,), jnp.float32, -bound, bound),
    }

    ref = reference(x1, x2, x3, params)

    # f32 path (matches PyTorch forward numerics).
    out_f32 = fusion_layer_enc(x1, x2, x3, params)
    out_f32 = jax.block_until_ready(out_f32)
    assert out_f32.shape == (B, D)
    assert jnp.allclose(out_f32, ref, atol=2e-3, rtol=2e-3), "f32 path mismatch vs reference"

    # bf16 fast path (bf16 MXU operands, f32 accumulation + residual/bias adds).
    out_bf16 = fusion_layer_enc(x1, x2, x3, params, compute_dtype=jnp.bfloat16)
    out_bf16 = jax.block_until_ready(out_bf16)
    assert jnp.allclose(out_bf16, ref, atol=5e-2, rtol=5e-2), "bf16 path mismatch vs reference"

    print("KERNEL_OK")
</pallas_src>

<mosaic_0001>
module attributes {stable_mosaic.version = 11 : i64} {
  func.func @fusion_enc_kernel(%arg0: i32, %arg1: memref<256x128xf32, #tpu.memory_space<vmem>>, %arg2: memref<256x128xf32, #tpu.memory_space<vmem>>, %arg3: memref<256x128xf32, #tpu.memory_space<vmem>>, %arg4: memref<128x128xf32, #tpu.memory_space<vmem>>, %arg5: memref<1x128xf32, #tpu.memory_space<vmem>>, %arg6: memref<128x128xf32, #tpu.memory_space<vmem>>, %arg7: memref<1x128xf32, #tpu.memory_space<vmem>>, %arg8: memref<128x128xf32, #tpu.memory_space<vmem>>, %arg9: memref<1x128xf32, #tpu.memory_space<vmem>>, %arg10: memref<256x128xf32, #tpu.memory_space<vmem>>) attributes {dimension_semantics = [#tpu.dimension_semantics<parallel>], iteration_bounds = array<i64: 2>, scalar_prefetch = 0 : i64, scratch_operands = 0 : i64, tpu.core_type = #tpu.core_type<tc>, window_params = [{transform_indices = @transform_0, window_bounds = array<i64: 256, 128>}, {transform_indices = @transform_1, window_bounds = array<i64: 256, 128>}, {transform_indices = @transform_2, window_bounds = array<i64: 256, 128>}, {pipeline_mode = #tpu.pipeline_mode<synchronous>, transform_indices = @transform_3, window_bounds = array<i64: 128, 128>}, {pipeline_mode = #tpu.pipeline_mode<synchronous>, transform_indices = @transform_4, window_bounds = array<i64: 1, 128>}, {pipeline_mode = #tpu.pipeline_mode<synchronous>, transform_indices = @transform_5, window_bounds = array<i64: 128, 128>}, {pipeline_mode = #tpu.pipeline_mode<synchronous>, transform_indices = @transform_6, window_bounds = array<i64: 1, 128>}, {pipeline_mode = #tpu.pipeline_mode<synchronous>, transform_indices = @transform_7, window_bounds = array<i64: 128, 128>}, {pipeline_mode = #tpu.pipeline_mode<synchronous>, transform_indices = @transform_8, window_bounds = array<i64: 1, 128>}, {transform_indices = @transform_9, window_bounds = array<i64: 256, 128>}]} {
    %c0 = arith.constant 0 : index
    %c0_0 = arith.constant 0 : index
    %0 = vector.load %arg1[%c0, %c0_0] : memref<256x128xf32, #tpu.memory_space<vmem>>, vector<256x128xf32>
    %c0_1 = arith.constant 0 : index
    %c0_2 = arith.constant 0 : index
    %1 = vector.load %arg2[%c0_1, %c0_2] : memref<256x128xf32, #tpu.memory_space<vmem>>, vector<256x128xf32>
    %c0_3 = arith.constant 0 : index
    %c0_4 = arith.constant 0 : index
    %2 = vector.load %arg3[%c0_3, %c0_4] : memref<256x128xf32, #tpu.memory_space<vmem>>, vector<256x128xf32>
    %c0_5 = arith.constant 0 : index
    %c0_6 = arith.constant 0 : index
    %3 = vector.load %arg4[%c0_5, %c0_6] : memref<128x128xf32, #tpu.memory_space<vmem>>, vector<128x128xf32>
    %cst = arith.constant dense<0.000000e+00> : vector<256x128xf32>
    %4 = tpu.matmul %0, %3, %cst {dimension_numbers = #tpu.dot_dimension_numbers<[1], [1], [0], [0], [0, 0, 1, 0], [], []>} : vector<256x128xf32>, vector<128x128xf32>, vector<256x128xf32> -> vector<256x128xf32>
    %c0_7 = arith.constant 0 : index
    %c0_8 = arith.constant 0 : index
    %5 = vector.load %arg5[%c0_7, %c0_8] : memref<1x128xf32, #tpu.memory_space<vmem>>, vector<1x128xf32>
    %6 = vector.broadcast %5 : vector<1x128xf32> to vector<256x128xf32>
    %7 = arith.addf %4, %6 : vector<256x128xf32>
    %8 = arith.addf %7, %1 : vector<256x128xf32>
    %c0_9 = arith.constant 0 : index
    %c0_10 = arith.constant 0 : index
    %9 = vector.load %arg6[%c0_9, %c0_10] : memref<128x128xf32, #tpu.memory_space<vmem>>, vector<128x128xf32>
    %cst_11 = arith.constant dense<0.000000e+00> : vector<256x128xf32>
    %10 = tpu.matmul %8, %9, %cst_11 {dimension_numbers = #tpu.dot_dimension_numbers<[1], [1], [0], [0], [0, 0, 1, 0], [], []>} : vector<256x128xf32>, vector<128x128xf32>, vector<256x128xf32> -> vector<256x128xf32>
    %c0_12 = arith.constant 0 : index
    %c0_13 = arith.constant 0 : index
    %11 = vector.load %arg7[%c0_12, %c0_13] : memref<1x128xf32, #tpu.memory_space<vmem>>, vector<1x128xf32>
    %12 = vector.broadcast %11 : vector<1x128xf32> to vector<256x128xf32>
    %13 = arith.addf %10, %12 : vector<256x128xf32>
    %14 = arith.addf %13, %2 : vector<256x128xf32>
    %c0_14 = arith.constant 0 : index
    %c0_15 = arith.constant 0 : index
    %15 = vector.load %arg8[%c0_14, %c0_15] : memref<128x128xf32, #tpu.memory_space<vmem>>, vector<128x128xf32>
    %cst_16 = arith.constant dense<0.000000e+00> : vector<256x128xf32>
    %16 = tpu.matmul %14, %15, %cst_16 {dimension_numbers = #tpu.dot_dimension_numbers<[1], [1], [0], [0], [0, 0, 1, 0], [], []>} : vector<256x128xf32>, vector<128x128xf32>, vector<256x128xf32> -> vector<256x128xf32>
    %c0_17 = arith.constant 0 : index
    %c0_18 = arith.constant 0 : index
    %17 = vector.load %arg9[%c0_17, %c0_18] : memref<1x128xf32, #tpu.memory_space<vmem>>, vector<1x128xf32>
    %18 = vector.broadcast %17 : vector<1x128xf32> to vector<256x128xf32>
    %19 = arith.addf %16, %18 : vector<256x128xf32>
    %c0_19 = arith.constant 0 : index
    %c0_20 = arith.constant 0 : index
    %20 = vector.load %arg10[%c0_19, %c0_20] : memref<256x128xf32, #tpu.memory_space<vmem>>, vector<256x128xf32>
    tpu.vector_store %arg10[%c0_19, %c0_20], %19 {strides = array<i32>} : memref<256x128xf32, #tpu.memory_space<vmem>>, vector<256x128xf32>,
    return
  }
  func.func @transform_0(%arg0: i32) -> (i32, i32) {
    %c0_i32 = arith.constant 0 : i32
    %c0_i32_0 = arith.constant 0 : i32
    return %arg0, %c0_i32 : i32, i32
  }
  func.func @transform_1(%arg0: i32) -> (i32, i32) {
    %c0_i32 = arith.constant 0 : i32
    %c0_i32_0 = arith.constant 0 : i32
    return %arg0, %c0_i32 : i32, i32
  }
  func.func @transform_2(%arg0: i32) -> (i32, i32) {
    %c0_i32 = arith.constant 0 : i32
    %c0_i32_0 = arith.constant 0 : i32
    return %arg0, %c0_i32 : i32, i32
  }
  func.func @transform_3(%arg0: i32) -> (i32, i32) {
    %c0_i32 = arith.constant 0 : i32
    %c0_i32_0 = arith.constant 0 : i32
    %c0_i32_1 = arith.constant 0 : i32
    return %c0_i32, %c0_i32_0 : i32, i32
  }
  func.func @transform_4(%arg0: i32) -> (i32, i32) {
    %c0_i32 = arith.constant 0 : i32
    %c0_i32_0 = arith.constant 0 : i32
    %c0_i32_1 = arith.constant 0 : i32
    return %c0_i32, %c0_i32_0 : i32, i32
  }
  func.func @transform_5(%arg0: i32) -> (i32, i32) {
    %c0_i32 = arith.constant 0 : i32
    %c0_i32_0 = arith.constant 0 : i32
    %c0_i32_1 = arith.constant 0 : i32
    return %c0_i32, %c0_i32_0 : i32, i32
  }
  func.func @transform_6(%arg0: i32) -> (i32, i32) {
    %c0_i32 = arith.constant 0 : i32
    %c0_i32_0 = arith.constant 0 : i32
    %c0_i32_1 = arith.constant 0 : i32
    return %c0_i32, %c0_i32_0 : i32, i32
  }
  func.func @transform_7(%arg0: i32) -> (i32, i32) {
    %c0_i32 = arith.constant 0 : i32
    %c0_i32_0 = arith.constant 0 : i32
    %c0_i32_1 = arith.constant 0 : i32
    return %c0_i32, %c0_i32_0 : i32, i32
  }
  func.func @transform_8(%arg0: i32) -> (i32, i32) {
    %c0_i32 = arith.constant 0 : i32
    %c0_i32_0 = arith.constant 0 : i32
    %c0_i32_1 = arith.constant 0 : i32
    return %c0_i32, %c0_i32_0 : i32, i32
  }
  func.func @transform_9(%arg0: i32) -> (i32, i32) {
    %c0_i32 = arith.constant 0 : i32
    %c0_i32_0 = arith.constant 0 : i32
    return %arg0, %c0_i32 : i32, i32
  }
}

</mosaic_0001>

<llo_original>
// kernel: tpu_custom_call.1
$region0: #{tpu_custom_call.1}
  #allocation0 [shape = 'u32[]', space=smem, size = 0x4, offset = 0x4, fixed_abs, tag = 'smem constant byte address 0x4 - core index']
  #allocation1 [shape = 'u32[144,128]{1,0:T(1,128)}', space=vmem, size = 0x12000, scoped, tag = 'internal scratch']
  %s0 = inlined_call_operand.hbm [shape: f32[512,128], index: 0, kind: input, shape index: {}]
  %s1 = inlined_call_operand.hbm [shape: f32[512,128], index: 1, kind: input, shape index: {}]
  %s2 = inlined_call_operand.hbm [shape: f32[512,128], index: 2, kind: input, shape index: {}]
  %s3 = inlined_call_operand.hbm [shape: f32[128,128], index: 3, kind: input, shape index: {}]
  %s4 = inlined_call_operand.vmem [shape: f32[1,128], index: 4, kind: input, shape index: {}]
  %s5 = inlined_call_operand.hbm [shape: f32[128,128], index: 5, kind: input, shape index: {}]
  %s6 = inlined_call_operand.vmem [shape: f32[1,128], index: 6, kind: input, shape index: {}]
  %s7 = inlined_call_operand.hbm [shape: f32[128,128], index: 7, kind: input, shape index: {}]
  %s8 = inlined_call_operand.vmem [shape: f32[1,128], index: 8, kind: input, shape index: {}]
  %s9 = inlined_call_operand.hbm [shape: f32[512,128], index: 9, kind: output, shape index: {}]
  %s10 = sld [smem:[#allocation0]]
  $region93: #{tpu_custom_call.1} parent=0
    _
  %s12 = ssub.s32 1, %s10
  %s13 = scalar_select 0, %s12, %s10
  $region1: #{tpu_custom_call.1} parent=0
    #allocation2 [shape = 'u8[262144]{0}', space=vmem, size = 0x40000, scoped, tag = 'input window, operand 0']
    #allocation3 [shape = 's32[2]{0}', space=sflag, size = 0x8, scoped, tag = 'scoped memory for tpu_custom_call.1']
    #allocation4 [shape = 's32[2]{0}', space=sflag, size = 0x8, scoped, tag = 'scoped memory for tpu_custom_call.1']
    #allocation5 [shape = 'u8[262144]{0}', space=vmem, size = 0x40000, scoped, tag = 'input window, operand 1']
    #allocation6 [shape = 's32[2]{0}', space=sflag, size = 0x8, scoped, tag = 'scoped memory for tpu_custom_call.1']
    #allocation7 [shape = 'u8[262144]{0}', space=vmem, size = 0x40000, scoped, tag = 'input window, operand 2']
    #allocation8 [shape = 'u8[65536]{0}', space=vmem, size = 0x10000, scoped, tag = 'input window, operand 3, single buffered']
    #allocation9 [shape = 's32[1]{0}', space=sflag, size = 0x4, scoped, tag = 'scoped memory for tpu_custom_call.1']
    #allocation10 [shape = 'u8[65536]{0}', space=vmem, size = 0x10000, scoped, tag = 'input window, operand 5, single buffered']
    #allocation11 [shape = 'u8[65536]{0}', space=vmem, size = 0x10000, scoped, tag = 'input window, operand 7, single buffered']
    #allocation12 [shape = 's32[1]{0}', space=sflag, size = 0x4, scoped, tag = 'scoped memory for tpu_custom_call.1']
    #allocation13 [shape = 'u8[262144]{0}', space=vmem, size = 0x40000, scoped, tag = 'output window, operand 0']
    %14 = vsyncpa [#allocation3], 0
    %s15 = scalar_lea.sflag [#allocation3], 1
    %16 = vsyncpa %s15, 0
    %17 = vsyncpa [#allocation6], 0
    %s18 = scalar_lea.sflag [#allocation6], 1
    %19 = vsyncpa %s18, 0
    %20 = vsyncpa [#allocation9], 0
    %21 = vsyncpa [#allocation12], 0
    %22 = vsyncpa [#allocation4], 0
    %s23 = scalar_lea.sflag [#allocation4], 1
    %24 = vsyncpa %s23, 0
    loop: start=0, step=1, limit=4
    $region2: #{tpu_custom_call.1} parent=1 // loop_pre_header
      _
    $region3: #{tpu_custom_call.1} parent=1 // loop_header
      %s26 = sphi 0, %s30
      %p27 = scmp.ge.s32.totalorder %s26, 4
      %s36 = sphi 0, %s38
      %s39 = sphi 0, %s36
      %s40 = sphi 0, %s39
      %s56 = sphi 0, %s40
      %s62 = sphi 0, %s64
      %s65 = sphi 0, %s62
      %s66 = sphi 0, %s65
      %s82 = sphi 0, %s66
      %s88 = sphi 0, %s90
      %s91 = sphi 0, %s88
      %s92 = sphi 0, %s91
      %s108 = sphi 0, %s92
      %s112 = sphi 0, %s112
      %s114 = sphi 0, %s112
      %s115 = sphi 0, %s114
      %s129 = sphi 0, %s115
      %s133 = sphi 0, %s133
      %s135 = sphi 0, %s133
      %s136 = sphi 0, %s135
      %s150 = sphi 0, %s136
      %s154 = sphi 0, %s154
      %s156 = sphi 0, %s154
      %s157 = sphi 0, %s156
      %s171 = sphi 0, %s157
      %s175 = sphi 0, %s175
      %s177 = sphi 0, %s175
      %s178 = sphi 0, %s177
      %s192 = sphi 0, %s178
      %s196 = sphi 0, %s196
      %s198 = sphi 0, %s196
      %s199 = sphi 0, %s198
      %s213 = sphi 0, %s199
      %s217 = sphi 0, %s217
      %s219 = sphi 0, %s217
      %s220 = sphi 0, %s219
      %s234 = sphi 0, %s220
      %s240 = sphi 0, %s242
      %s243 = sphi 0, %s240
      %s244 = sphi 0, %s243
      %s260 = sphi 0, %s244
    $region4: #{tpu_custom_call.1} parent=1 // loop_header_branch
      %29 = sbr.rel (%p27) target = $region8
    $region5: #{tpu_custom_call.1} parent=1 // loop_body
      %s31 = ssub.s32 %s26, 1
      %s32 = ssub.s32 %s26, 2
      %s33 = sadd.s32 %s26, 1
      %s34 = ssub.s32 %s26, %s33
      %p35 = scmp.eq.s32.totalorder %s34, 0
      %s37 = sadd.s32 %s36, 1
      %s38 = scalar_select %p35, %s36, %s37
      %p41 = pneg %p35
      %p42 = scmp.eq.s32.totalorder %s26, 1
      %p43 = por %p41, %p42
      %p44 = scmp.ne.s32.totalorder %s36, %s39
      %p45 = scmp.eq.s32.totalorder %s26, 0
      %p46 = por %p44, %p45
      %p47 = scmp.ne.s32.totalorder %s36, %s39
      %p48 = scmp.eq.s32.totalorder %s31, 1
      %p49 = por %p47, %p48
      %p50 = scmp.ne.s32.totalorder %s39, %s40
      %p51 = scmp.eq.s32.totalorder %s31, 0
      %p52 = por %p50, %p51
      %p53 = scmp.ne.s32.totalorder %s39, %s40
      %p54 = scmp.eq.s32.totalorder %s32, 1
      %p55 = por %p53, %p54
      %p57 = scmp.ne.s32.totalorder %s40, %s56
      %p58 = scmp.eq.s32.totalorder %s32, 0
      %p59 = por %p57, %p58
      %s60 = ssub.s32 %s26, %s33
      %p61 = scmp.eq.s32.totalorder %s60, 0
      %s63 = sadd.s32 %s62, 1
      %s64 = scalar_select %p61, %s62, %s63
      %p67 = pneg %p61
      %p68 = scmp.eq.s32.totalorder %s26, 1
      %p69 = por %p67, %p68
      %p70 = scmp.ne.s32.totalorder %s62, %s65
      %p71 = scmp.eq.s32.totalorder %s26, 0
      %p72 = por %p70, %p71
      %p73 = scmp.ne.s32.totalorder %s62, %s65
      %p74 = scmp.eq.s32.totalorder %s31, 1
      %p75 = por %p73, %p74
      %p76 = scmp.ne.s32.totalorder %s65, %s66
      %p77 = scmp.eq.s32.totalorder %s31, 0
      %p78 = por %p76, %p77
      %p79 = scmp.ne.s32.totalorder %s65, %s66
      %p80 = scmp.eq.s32.totalorder %s32, 1
      %p81 = por %p79, %p80
      %p83 = scmp.ne.s32.totalorder %s66, %s82
      %p84 = scmp.eq.s32.totalorder %s32, 0
      %p85 = por %p83, %p84
      %s86 = ssub.s32 %s26, %s33
      %p87 = scmp.eq.s32.totalorder %s86, 0
      %s89 = sadd.s32 %s88, 1
      %s90 = scalar_select %p87, %s88, %s89
      %p93 = pneg %p87
      %p94 = scmp.eq.s32.totalorder %s26, 1
      %p95 = por %p93, %p94
      %p96 = scmp.ne.s32.totalorder %s88, %s91
      %p97 = scmp.eq.s32.totalorder %s26, 0
      %p98 = por %p96, %p97
      %p99 = scmp.ne.s32.totalorder %s88, %s91
      %p100 = scmp.eq.s32.totalorder %s31, 1
      %p101 = por %p99, %p100
      %p102 = scmp.ne.s32.totalorder %s91, %s92
      %p103 = scmp.eq.s32.totalorder %s31, 0
      %p104 = por %p102, %p103
      %p105 = scmp.ne.s32.totalorder %s91, %s92
      %p106 = scmp.eq.s32.totalorder %s32, 1
      %p107 = por %p105, %p106
      %p109 = scmp.ne.s32.totalorder %s92, %s108
      %p110 = scmp.eq.s32.totalorder %s32, 0
      %p111 = por %p109, %p110
      %s113 = sadd.s32 %s112, 1
      %p116 = scmp.eq.s32.totalorder %s26, 1
      %p117 = scmp.ne.s32.totalorder %s112, %s114
      %p118 = scmp.eq.s32.totalorder %s26, 0
      %p119 = por %p117, %p118
      %p120 = scmp.ne.s32.totalorder %s112, %s114
      %p121 = scmp.eq.s32.totalorder %s31, 1
      %p122 = por %p120, %p121
      %p123 = scmp.ne.s32.totalorder %s114, %s115
      %p124 = scmp.eq.s32.totalorder %s31, 0
      %p125 = por %p123, %p124
      %p126 = scmp.ne.s32.totalorder %s114, %s115
      %p127 = scmp.eq.s32.totalorder %s32, 1
      %p128 = por %p126, %p127
      %p130 = scmp.ne.s32.totalorder %s115, %s129
      %p131 = scmp.eq.s32.totalorder %s32, 0
      %p132 = por %p130, %p131
      %s134 = sadd.s32 %s133, 1
      %p137 = scmp.eq.s32.totalorder %s26, 1
      %p138 = scmp.ne.s32.totalorder %s133, %s135
      %p139 = scmp.eq.s32.totalorder %s26, 0
      %p140 = por %p138, %p139
      %p141 = scmp.ne.s32.totalorder %s133, %s135
      %p142 = scmp.eq.s32.totalorder %s31, 1
      %p143 = por %p141, %p142
      %p144 = scmp.ne.s32.totalorder %s135, %s136
      %p145 = scmp.eq.s32.totalorder %s31, 0
      %p146 = por %p144, %p145
      %p147 = scmp.ne.s32.totalorder %s135, %s136
      %p148 = scmp.eq.s32.totalorder %s32, 1
      %p149 = por %p147, %p148
      %p151 = scmp.ne.s32.totalorder %s136, %s150
      %p152 = scmp.eq.s32.totalorder %s32, 0
      %p153 = por %p151, %p152
      %s155 = sadd.s32 %s154, 1
      %p158 = scmp.eq.s32.totalorder %s26, 1
      %p159 = scmp.ne.s32.totalorder %s154, %s156
      %p160 = scmp.eq.s32.totalorder %s26, 0
      %p161 = por %p159, %p160
      %p162 = scmp.ne.s32.totalorder %s154, %s156
      %p163 = scmp.eq.s32.totalorder %s31, 1
      %p164 = por %p162, %p163
      %p165 = scmp.ne.s32.totalorder %s156, %s157
      %p166 = scmp.eq.s32.totalorder %s31, 0
      %p167 = por %p165, %p166
      %p168 = scmp.ne.s32.totalorder %s156, %s157
      %p169 = scmp.eq.s32.totalorder %s32, 1
      %p170 = por %p168, %p169
      %p172 = scmp.ne.s32.totalorder %s157, %s171
      %p173 = scmp.eq.s32.totalorder %s32, 0
      %p174 = por %p172, %p173
      %s176 = sadd.s32 %s175, 1
      %p179 = scmp.eq.s32.totalorder %s26, 1
      %p180 = scmp.ne.s32.totalorder %s175, %s177
      %p181 = scmp.eq.s32.totalorder %s26, 0
      %p182 = por %p180, %p181
      %p183 = scmp.ne.s32.totalorder %s175, %s177
      %p184 = scmp.eq.s32.totalorder %s31, 1
      %p185 = por %p183, %p184
      %p186 = scmp.ne.s32.totalorder %s177, %s178
      %p187 = scmp.eq.s32.totalorder %s31, 0
      %p188 = por %p186, %p187
      %p189 = scmp.ne.s32.totalorder %s177, %s178
      %p190 = scmp.eq.s32.totalorder %s32, 1
      %p191 = por %p189, %p190
      %p193 = scmp.ne.s32.totalorder %s178, %s192
      %p194 = scmp.eq.s32.totalorder %s32, 0
      %p195 = por %p193, %p194
      %s197 = sadd.s32 %s196, 1
      %p200 = scmp.eq.s32.totalorder %s26, 1
      %p201 = scmp.ne.s32.totalorder %s196, %s198
      %p202 = scmp.eq.s32.totalorder %s26, 0
      %p203 = por %p201, %p202
      %p204 = scmp.ne.s32.totalorder %s196, %s198
      %p205 = scmp.eq.s32.totalorder %s31, 1
      %p206 = por %p204, %p205
      %p207 = scmp.ne.s32.totalorder %s198, %s199
      %p208 = scmp.eq.s32.totalorder %s31, 0
      %p209 = por %p207, %p208
      %p210 = scmp.ne.s32.totalorder %s198, %s199
      %p211 = scmp.eq.s32.totalorder %s32, 1
      %p212 = por %p210, %p211
      %p214 = scmp.ne.s32.totalorder %s199, %s213
      %p215 = scmp.eq.s32.totalorder %s32, 0
      %p216 = por %p214, %p215
      %s218 = sadd.s32 %s217, 1
      %p221 = scmp.eq.s32.totalorder %s26, 1
      %p222 = scmp.ne.s32.totalorder %s217, %s219
      %p223 = scmp.eq.s32.totalorder %s26, 0
      %p224 = por %p222, %p223
      %p225 = scmp.ne.s32.totalorder %s217, %s219
      %p226 = scmp.eq.s32.totalorder %s31, 1
      %p227 = por %p225, %p226
      %p228 = scmp.ne.s32.totalorder %s219, %s220
      %p229 = scmp.eq.s32.totalorder %s31, 0
      %p230 = por %p228, %p229
      %p231 = scmp.ne.s32.totalorder %s219, %s220
      %p232 = scmp.eq.s32.totalorder %s32, 1
      %p233 = por %p231, %p232
      %p235 = scmp.ne.s32.totalorder %s220, %s234
      %p236 = scmp.eq.s32.totalorder %s32, 0
      %p237 = por %p235, %p236
      %s238 = ssub.s32 %s26, %s33
      %p239 = scmp.eq.s32.totalorder %s238, 0
      %s241 = sadd.s32 %s240, 1
      %s242 = scalar_select %p239, %s240, %s241
      %p245 = pneg %p239
      %p246 = scmp.eq.s32.totalorder %s26, 1
      %p247 = por %p245, %p246
      %p248 = scmp.ne.s32.totalorder %s240, %s243
      %p249 = scmp.eq.s32.totalorder %s26, 0
      %p250 = por %p248, %p249
      %p251 = scmp.ne.s32.totalorder %s240, %s243
      %p252 = scmp.eq.s32.totalorder %s31, 1
      %p253 = por %p251, %p252
      %p254 = scmp.ne.s32.totalorder %s243, %s244
      %p255 = scmp.eq.s32.totalorder %s31, 0
      %p256 = por %p254, %p255
      %p257 = scmp.ne.s32.totalorder %s243, %s244
      %p258 = scmp.eq.s32.totalorder %s32, 1
      %p259 = por %p257, %p258
      %p261 = scmp.ne.s32.totalorder %s244, %s260
      %p262 = scmp.eq.s32.totalorder %s32, 0
      %p263 = por %p261, %p262
      %p264 = scmp.le.s32.totalorder 1, %s26
      %p265 = scmp.lt.s32.totalorder %s26, 3
      %p266 = pnand %p264, %p265
      %p267 = pneg %p266
      // Predicated region
      $region9: #{tpu_custom_call.1} parent=5 // pred_check
        _
      $region10: #{tpu_custom_call.1} parent=5 // pred_check_branch
        %269 = sbr.rel (%p266) target = $region12
      $region11: #{tpu_custom_call.1} parent=5 // pred_region
        %s270 = ssub.s32 %s26, 1
        // Predicated region
        $region13: #{tpu_custom_call.1} parent=11 // pred_check
          %p271 = pneg %p125
        $region14: #{tpu_custom_call.1} parent=11 // pred_check_branch
          %273 = sbr.rel (%p271) target = $region16
        $region15: #{tpu_custom_call.1} parent=11 // pred_region
          %s275 = ssub.s32 2048, 2048
          %276 = vsyncadd [#allocation9], %s275
          %s277 = sshll.u32 [#allocation8], 4
          %s278 = int_to_ptr.vmem [resolvable:$true] %s277
          %283 = dma.hbm_to_vmem [thread:$0]  %s3, 2048, %s278, [#allocation9], 128, 128, 8
        $region16: #{tpu_custom_call.1} parent=11 // pred_fallthru
          _
        // Predicated region
        $region17: #{tpu_custom_call.1} parent=11 // pred_check
          %p284 = pneg %p146
        $region18: #{tpu_custom_call.1} parent=11 // pred_check_branch
          %286 = sbr.rel (%p284) target = $region20
        $region19: #{tpu_custom_call.1} parent=11 // pred_region
          _
        $region20: #{tpu_custom_call.1} parent=11 // pred_fallthru
          _
        // Predicated region
        $region21: #{tpu_custom_call.1} parent=11 // pred_check
          %p287 = pneg %p167
        $region22: #{tpu_custom_call.1} parent=11 // pred_check_branch
          %289 = sbr.rel (%p287) target = $region24
        $region23: #{tpu_custom_call.1} parent=11 // pred_region
          %s291 = ssub.s32 2048, 2048
          %292 = vsyncadd [#allocation9], %s291
          %s293 = sshll.u32 [#allocation10], 4
          %s294 = int_to_ptr.vmem [resolvable:$true] %s293
          %299 = dma.hbm_to_vmem [thread:$0]  %s5, 2048, %s294, [#allocation9], 128, 128, 8
        $region24: #{tpu_custom_call.1} parent=11 // pred_fallthru
          _
        // Predicated region
        $region25: #{tpu_custom_call.1} parent=11 // pred_check
          %p300 = pneg %p188
        $region26: #{tpu_custom_call.1} parent=11 // pred_check_branch
          %302 = sbr.rel (%p300) target = $region28
        $region27: #{tpu_custom_call.1} parent=11 // pred_region
          _
        $region28: #{tpu_custom_call.1} parent=11 // pred_fallthru
          _
        // Predicated region
        $region29: #{tpu_custom_call.1} parent=11 // pred_check
          %p303 = pneg %p209
        $region30: #{tpu_custom_call.1} parent=11 // pred_check_branch
          %305 = sbr.rel (%p303) target = $region32
        $region31: #{tpu_custom_call.1} parent=11 // pred_region
          %s307 = ssub.s32 2048, 2048
          %308 = vsyncadd [#allocation12], %s307
          %s309 = sshll.u32 [#allocation11], 4
          %s310 = int_to_ptr.vmem [resolvable:$true] %s309
          %315 = dma.hbm_to_vmem [thread:$0]  %s7, 2048, %s310, [#allocation12], 128, 128, 8
        $region32: #{tpu_custom_call.1} parent=11 // pred_fallthru
          _
        // Predicated region
        $region33: #{tpu_custom_call.1} parent=11 // pred_check
          %p316 = pneg %p230
        $region34: #{tpu_custom_call.1} parent=11 // pred_check_branch
          %318 = sbr.rel (%p316) target = $region36
        $region35: #{tpu_custom_call.1} parent=11 // pred_region
          _
        $region36: #{tpu_custom_call.1} parent=11 // pred_fallthru
          _
      $region12: #{tpu_custom_call.1} parent=5 // pred_fallthru
        _
      %p319 = scmp.lt.s32.totalorder %s26, 2
      // Predicated region
      $region37: #{tpu_custom_call.1} parent=5 // pred_check
        %p320 = pneg %p319
      $region38: #{tpu_custom_call.1} parent=5 // pred_check_branch
        %322 = sbr.rel (%p320) target = $region40
      $region39: #{tpu_custom_call.1} parent=5 // pred_region
        // Predicated region
        $region41: #{tpu_custom_call.1} parent=39 // pred_check
          %p323 = pneg %p46
        $region42: #{tpu_custom_call.1} parent=39 // pred_check_branch
          %325 = sbr.rel (%p323) target = $region44
        $region43: #{tpu_custom_call.1} parent=39 // pred_region
          %s326 = sand.u32 %s36, 1
          %s327 = scalar_lea.sflag [#allocation3], %s326
          %s328 = sand.u32 %s36, 1
          %s329 = smul.addr %s328, 256
          %s330 = scalar_lea.vmem [#allocation2], %s329
          %s331 = smul.u32 32, %s26
          %s333 = ssub.s32 4096, 4096
          %334 = vsyncadd %s327, %s333
          %s335 = smul.addr %s331, 128
          %s336 = scalar_lea.hbm %s0, %s335
          %s337 = sshll.u32 %s330, 4
          %s338 = int_to_ptr.vmem [resolvable:$true] %s337
          %343 = dma.hbm_to_vmem [thread:$0]  %s336, 4096, %s338, %s327, 128, 128, 8
        $region44: #{tpu_custom_call.1} parent=39 // pred_fallthru
          _
        // Predicated region
        $region45: #{tpu_custom_call.1} parent=39 // pred_check
          %p344 = pneg %p72
        $region46: #{tpu_custom_call.1} parent=39 // pred_check_branch
          %346 = sbr.rel (%p344) target = $region48
        $region47: #{tpu_custom_call.1} parent=39 // pred_region
          %s347 = sand.u32 %s26, 1
          %s348 = scalar_lea.sflag [#allocation6], %s347
          %s349 = sand.u32 %s62, 1
          %s350 = smul.addr %s349, 256
          %s351 = scalar_lea.vmem [#allocation5], %s350
          %s352 = smul.u32 32, %s26
          %s354 = ssub.s32 4096, 4096
          %355 = vsyncadd %s348, %s354
          %s356 = smul.addr %s352, 128
          %s357 = scalar_lea.hbm %s1, %s356
          %s358 = sshll.u32 %s351, 4
          %s359 = int_to_ptr.vmem [resolvable:$true] %s358
          %364 = dma.hbm_to_vmem [thread:$0]  %s357, 4096, %s359, %s348, 128, 128, 8
        $region48: #{tpu_custom_call.1} parent=39 // pred_fallthru
          _
        // Predicated region
        $region49: #{tpu_custom_call.1} parent=39 // pred_check
          %p365 = pneg %p98
        $region50: #{tpu_custom_call.1} parent=39 // pred_check_branch
          %367 = sbr.rel (%p365) target = $region52
        $region51: #{tpu_custom_call.1} parent=39 // pred_region
          %s368 = sand.u32 %s26, 1
          %s369 = scalar_lea.sflag [#allocation6], %s368
          %s370 = sand.u32 %s88, 1
          %s371 = smul.addr %s370, 256
          %s372 = scalar_lea.vmem [#allocation7], %s371
          %s373 = smul.u32 32, %s26
          %s375 = ssub.s32 4096, 4096
          %376 = vsyncadd %s369, %s375
          %s377 = smul.addr %s373, 128
          %s378 = scalar_lea.hbm %s2, %s377
          %s379 = sshll.u32 %s372, 4
          %s380 = int_to_ptr.vmem [resolvable:$true] %s379
          %385 = dma.hbm_to_vmem [thread:$0]  %s378, 4096, %s380, %s369, 128, 128, 8
        $region52: #{tpu_custom_call.1} parent=39 // pred_fallthru
          _
      $region40: #{tpu_custom_call.1} parent=5 // pred_fallthru
        _
      %p386 = scmp.le.s32.totalorder 1, %s26
      %p387 = scmp.lt.s32.totalorder %s26, 3
      %p388 = pnand %p386, %p387
      %p389 = pneg %p388
      // Predicated region
      $region53: #{tpu_custom_call.1} parent=5 // pred_check
        _
      $region54: #{tpu_custom_call.1} parent=5 // pred_check_branch
        %391 = sbr.rel (%p388) target = $region56
      $region55: #{tpu_custom_call.1} parent=5 // pred_region
        %s392 = ssub.s32 %s26, 1
        %s393 = sand.u32 %s39, 1
        %s394 = scalar_lea.sflag [#allocation3], %s393
        %s395 = sand.u32 %s39, 1
        %s396 = smul.addr %s395, 256
        %s397 = scalar_lea.vmem [#allocation2], %s396
        // Predicated region
        $region57: #{tpu_custom_call.1} parent=55 // pred_check
          %p398 = pneg %p52
        $region58: #{tpu_custom_call.1} parent=55 // pred_check_branch
          %400 = sbr.rel (%p398) target = $region60
        $region59: #{tpu_custom_call.1} parent=55 // pred_region
          %401 = dma.done %s394, 4096
        $region60: #{tpu_custom_call.1} parent=55 // pred_fallthru
          _
        %s402 = sand.u32 %s31, 1
        %s403 = scalar_lea.sflag [#allocation6], %s402
        %s404 = sand.u32 %s65, 1
        %s405 = smul.addr %s404, 256
        %s406 = scalar_lea.vmem [#allocation5], %s405
        // Predicated region
        $region61: #{tpu_custom_call.1} parent=55 // pred_check
          %p407 = pneg %p78
        $region62: #{tpu_custom_call.1} parent=55 // pred_check_branch
          %409 = sbr.rel (%p407) target = $region64
        $region63: #{tpu_custom_call.1} parent=55 // pred_region
          %410 = dma.done %s403, 4096
        $region64: #{tpu_custom_call.1} parent=55 // pred_fallthru
          _
        %s411 = sand.u32 %s31, 1
        %s412 = scalar_lea.sflag [#allocation6], %s411
        %s413 = sand.u32 %s91, 1
        %s414 = smul.addr %s413, 256
        %s415 = scalar_lea.vmem [#allocation7], %s414
        // Predicated region
        $region65: #{tpu_custom_call.1} parent=55 // pred_check
          %p416 = pneg %p104
        $region66: #{tpu_custom_call.1} parent=55 // pred_check_branch
          %418 = sbr.rel (%p416) target = $region68
        $region67: #{tpu_custom_call.1} parent=55 // pred_region
          %419 = dma.done %s412, 4096
        $region68: #{tpu_custom_call.1} parent=55 // pred_fallthru
          _
        // Predicated region
        $region69: #{tpu_custom_call.1} parent=55 // pred_check
          %p420 = pneg %p125
        $region70: #{tpu_custom_call.1} parent=55 // pred_check_branch
          %422 = sbr.rel (%p420) target = $region72
        $region71: #{tpu_custom_call.1} parent=55 // pred_region
          %423 = dma.done [#allocation9], 2048
        $region72: #{tpu_custom_call.1} parent=55 // pred_fallthru
          _
        // Predicated region
        $region73: #{tpu_custom_call.1} parent=55 // pred_check
          %p424 = pneg %p167
        $region74: #{tpu_custom_call.1} parent=55 // pred_check_branch
          %426 = sbr.rel (%p424) target = $region76
        $region75: #{tpu_custom_call.1} parent=55 // pred_region
          %427 = dma.done [#allocation9], 2048
        $region76: #{tpu_custom_call.1} parent=55 // pred_fallthru
          _
        // Predicated region
        $region77: #{tpu_custom_call.1} parent=55 // pred_check
          %p428 = pneg %p209
        $region78: #{tpu_custom_call.1} parent=55 // pred_check_branch
          %430 = sbr.rel (%p428) target = $region80
        $region79: #{tpu_custom_call.1} parent=55 // pred_region
          %431 = dma.done [#allocation12], 2048
        $region80: #{tpu_custom_call.1} parent=55 // pred_fallthru
          _
        %s432 = sand.u32 %s39, 1
        %s433 = scalar_lea.sflag [#allocation3], %s432
        %s434 = sand.u32 %s39, 1
        %s435 = smul.addr %s434, 256
        %s436 = scalar_lea.vmem [#allocation2], %s435
        %p437 = pneg %p52
        %p438 = pneg %p49
        %s439 = sand.u32 %s31, 1
        %s440 = scalar_lea.sflag [#allocation6], %s439
        %s441 = sand.u32 %s65, 1
        %s442 = smul.addr %s441, 256
        %s443 = scalar_lea.vmem [#allocation5], %s442
        %p444 = pneg %p78
        %p445 = pneg %p75
        %s446 = sand.u32 %s31, 1
        %s447 = scalar_lea.sflag [#allocation6], %s446
        %s448 = sand.u32 %s91, 1
        %s449 = smul.addr %s448, 256
        %s450 = scalar_lea.vmem [#allocation7], %s449
        %p451 = pneg %p104
        %p452 = pneg %p101
        %p453 = pneg %p125
        %p454 = pneg %p122
        %p455 = pneg %p146
        %p456 = pneg %p143
        %p457 = pneg %p167
        %p458 = pneg %p164
        %p459 = pneg %p188
        %p460 = pneg %p185
        %p461 = pneg %p209
        %p462 = pneg %p206
        %p463 = pneg %p230
        %p464 = pneg %p227
        %p465 = pneg %p256
        %p466 = pneg %p253
        %s467 = sand.u32 %s243, 1
        %s468 = scalar_lea.sflag [#allocation4], %s467
        %s469 = sand.u32 %s243, 1
        %s470 = smul.addr %s469, 256
        %s471 = scalar_lea.vmem [#allocation13], %s470
        %s472 = smul.u32 32, %s31
        %s473 = smul.u32 32, %s31
        %s474 = smul.u32 32, %s31
        %s475 = smul.u32 32, %s31
        %v476 = vld [vmem:[%s397] sm:$0xff]
        %v477 = vld [vmem:[%s397 + $0x8] sm:$0xff]
        %v478 = vld [vmem:[%s397 + $0x10] sm:$0xff]
        %v479 = vld [vmem:[%s397 + $0x18] sm:$0xff]
        %v480 = vld [vmem:[%s397 + $0x20] sm:$0xff]
        %v481 = vld [vmem:[%s397 + $0x28] sm:$0xff]
        %v482 = vld [vmem:[%s397 + $0x30] sm:$0xff]
        %v483 = vld [vmem:[%s397 + $0x38] sm:$0xff]
        %v484 = vld [vmem:[%s397 + $0x40] sm:$0xff]
        %v485 = vld [vmem:[%s397 + $0x48] sm:$0xff]
        %v486 = vld [vmem:[%s397 + $0x50] sm:$0xff]
        %v487 = vld [vmem:[%s397 + $0x58] sm:$0xff]
        %v488 = vld [vmem:[%s397 + $0x60] sm:$0xff]
        %v489 = vld [vmem:[%s397 + $0x68] sm:$0xff]
        %v490 = vld [vmem:[%s397 + $0x70] sm:$0xff]
        %v491 = vld [vmem:[%s397 + $0x78] sm:$0xff]
        %v492 = vld [vmem:[%s397 + $0x80] sm:$0xff]
        %v493 = vld [vmem:[%s397 + $0x88] sm:$0xff]
        %v494 = vld [vmem:[%s397 + $0x90] sm:$0xff]
        %v495 = vld [vmem:[%s397 + $0x98] sm:$0xff]
        %v496 = vld [vmem:[%s397 + $0xa0] sm:$0xff]
        %v497 = vld [vmem:[%s397 + $0xa8] sm:$0xff]
        %v498 = vld [vmem:[%s397 + $0xb0] sm:$0xff]
        %v499 = vld [vmem:[%s397 + $0xb8] sm:$0xff]
        %v500 = vld [vmem:[%s397 + $0xc0] sm:$0xff]
        %v501 = vld [vmem:[%s397 + $0xc8] sm:$0xff]
        %v502 = vld [vmem:[%s397 + $0xd0] sm:$0xff]
        %v503 = vld [vmem:[%s397 + $0xd8] sm:$0xff]
        %v504 = vld [vmem:[%s397 + $0xe0] sm:$0xff]
        %v505 = vld [vmem:[%s397 + $0xe8] sm:$0xff]
        %v506 = vld [vmem:[%s397 + $0xf0] sm:$0xff]
        %v507 = vld [vmem:[%s397 + $0xf8] sm:$0xff]
        %v508 = vld [vmem:[%s406] sm:$0xff]
        %v509 = vld [vmem:[%s406 + $0x8] sm:$0xff]
        %v510 = vld [vmem:[%s406 + $0x10] sm:$0xff]
        %v511 = vld [vmem:[%s406 + $0x18] sm:$0xff]
        %v512 = vld [vmem:[%s406 + $0x20] sm:$0xff]
        %v513 = vld [vmem:[%s406 + $0x28] sm:$0xff]
        %v514 = vld [vmem:[%s406 + $0x30] sm:$0xff]
        %v515 = vld [vmem:[%s406 + $0x38] sm:$0xff]
        %v516 = vld [vmem:[%s406 + $0x40] sm:$0xff]
        %v517 = vld [vmem:[%s406 + $0x48] sm:$0xff]
        %v518 = vld [vmem:[%s406 + $0x50] sm:$0xff]
        %v519 = vld [vmem:[%s406 + $0x58] sm:$0xff]
        %v520 = vld [vmem:[%s406 + $0x60] sm:$0xff]
        %v521 = vld [vmem:[%s406 + $0x68] sm:$0xff]
        %v522 = vld [vmem:[%s406 + $0x70] sm:$0xff]
        %v523 = vld [vmem:[%s406 + $0x78] sm:$0xff]
        %v524 = vld [vmem:[%s406 + $0x80] sm:$0xff]
        %v525 = vld [vmem:[%s406 + $0x88] sm:$0xff]
        %v526 = vld [vmem:[%s406 + $0x90] sm:$0xff]
        %v527 = vld [vmem:[%s406 + $0x98] sm:$0xff]
        %v528 = vld [vmem:[%s406 + $0xa0] sm:$0xff]
        %v529 = vld [vmem:[%s406 + $0xa8] sm:$0xff]
        %v530 = vld [vmem:[%s406 + $0xb0] sm:$0xff]
        %v531 = vld [vmem:[%s406 + $0xb8] sm:$0xff]
        %v532 = vld [vmem:[%s406 + $0xc0] sm:$0xff]
        %v533 = vld [vmem:[%s406 + $0xc8] sm:$0xff]
        %v534 = vld [vmem:[%s406 + $0xd0] sm:$0xff]
        %v535 = vld [vmem:[%s406 + $0xd8] sm:$0xff]
        %v536 = vld [vmem:[%s406 + $0xe0] sm:$0xff]
        %v537 = vld [vmem:[%s406 + $0xe8] sm:$0xff]
        %v538 = vld [vmem:[%s406 + $0xf0] sm:$0xff]
        %v539 = vld [vmem:[%s406 + $0xf8] sm:$0xff]
        %v540 = vld [vmem:[%s415] sm:$0xff]
        %v541 = vld [vmem:[%s415 + $0x8] sm:$0xff]
        %v542 = vld [vmem:[%s415 + $0x10] sm:$0xff]
        %v543 = vld [vmem:[%s415 + $0x18] sm:$0xff]
        %v544 = vld [vmem:[%s415 + $0x20] sm:$0xff]
        %v545 = vld [vmem:[%s415 + $0x28] sm:$0xff]
        %v546 = vld [vmem:[%s415 + $0x30] sm:$0xff]
        %v547 = vld [vmem:[%s415 + $0x38] sm:$0xff]
        %v548 = vld [vmem:[%s415 + $0x40] sm:$0xff]
        %v549 = vld [vmem:[%s415 + $0x48] sm:$0xff]
        %v550 = vld [vmem:[%s415 + $0x50] sm:$0xff]
        %v551 = vld [vmem:[%s415 + $0x58] sm:$0xff]
        %v552 = vld [vmem:[%s415 + $0x60] sm:$0xff]
        %v553 = vld [vmem:[%s415 + $0x68] sm:$0xff]
        %v554 = vld [vmem:[%s415 + $0x70] sm:$0xff]
        %v555 = vld [vmem:[%s415 + $0x78] sm:$0xff]
        %v556 = vld [vmem:[%s415 + $0x80] sm:$0xff]
        %v557 = vld [vmem:[%s415 + $0x88] sm:$0xff]
        %v558 = vld [vmem:[%s415 + $0x90] sm:$0xff]
        %v559 = vld [vmem:[%s415 + $0x98] sm:$0xff]
        %v560 = vld [vmem:[%s415 + $0xa0] sm:$0xff]
        %v561 = vld [vmem:[%s415 + $0xa8] sm:$0xff]
        %v562 = vld [vmem:[%s415 + $0xb0] sm:$0xff]
        %v563 = vld [vmem:[%s415 + $0xb8] sm:$0xff]
        %v564 = vld [vmem:[%s415 + $0xc0] sm:$0xff]
        %v565 = vld [vmem:[%s415 + $0xc8] sm:$0xff]
        %v566 = vld [vmem:[%s415 + $0xd0] sm:$0xff]
        %v567 = vld [vmem:[%s415 + $0xd8] sm:$0xff]
        %v568 = vld [vmem:[%s415 + $0xe0] sm:$0xff]
        %v569 = vld [vmem:[%s415 + $0xe8] sm:$0xff]
        %v570 = vld [vmem:[%s415 + $0xf0] sm:$0xff]
        %v571 = vld [vmem:[%s415 + $0xf8] sm:$0xff]
        %v572 = vld [vmem:[#allocation8] sm:$0xff]
        %v573 = vld [vmem:[#allocation8 + $0x8] sm:$0xff]
        %v574 = vld [vmem:[#allocation8 + $0x10] sm:$0xff]
        %v575 = vld [vmem:[#allocation8 + $0x18] sm:$0xff]
        %v576 = vld [vmem:[#allocation8 + $0x20] sm:$0xff]
        %v577 = vld [vmem:[#allocation8 + $0x28] sm:$0xff]
        %v578 = vld [vmem:[#allocation8 + $0x30] sm:$0xff]
        %v579 = vld [vmem:[#allocation8 + $0x38] sm:$0xff]
        %v580 = vld [vmem:[#allocation8 + $0x40] sm:$0xff]
        %v581 = vld [vmem:[#allocation8 + $0x48] sm:$0xff]
        %v582 = vld [vmem:[#allocation8 + $0x50] sm:$0xff]
        %v583 = vld [vmem:[#allocation8 + $0x58] sm:$0xff]
        %v584 = vld [vmem:[#allocation8 + $0x60] sm:$0xff]
        %v585 = vld [vmem:[#allocation8 + $0x68] sm:$0xff]
        %v586 = vld [vmem:[#allocation8 + $0x70] sm:$0xff]
        %v587 = vld [vmem:[#allocation8 + $0x78] sm:$0xff]
        %v588 = vld [vmem:[%s4] sm:$0x1]
        %v590 = vlaneseq
        %v591 = vshrl.u32 %v590, 7
        %v592 = vsub.s32 0, %v591
        %v593 = vrot.slane %v588, %v592
        %595 = vmatprep.subr.mxu0 0.0
        %596 = vmatpush1.xpose.msra.mxu0 %v572
        %597 = vmatprep.subr.mxu0 0.0
        %598 = vmatpush1.xpose.msra.mxu0 %v573
        %599 = vmatprep.subr.mxu0 0.0
        %600 = vmatpush1.xpose.msra.mxu0 %v574
        %601 = vmatprep.subr.mxu0 0.0
        %602 = vmatpush1.xpose.msra.mxu0 %v575
        %603 = vmatprep.subr.mxu0 0.0
        %604 = vmatpush1.xpose.msra.mxu0 %v576
        %605 = vmatprep.subr.mxu0 0.0
        %606 = vmatpush1.xpose.msra.mxu0 %v577
        %607 = vmatprep.subr.mxu0 0.0
        %608 = vmatpush1.xpose.msra.mxu0 %v578
        %609 = vmatprep.subr.mxu0 0.0
        %610 = vmatpush1.xpose.msra.mxu0 %v579
        %611 = vmatprep.subr.mxu0 0.0
        %612 = vmatpush1.xpose.msra.mxu0 %v580
        %613 = vmatprep.subr.mxu0 0.0
        %614 = vmatpush1.xpose.msra.mxu0 %v581
        %615 = vmatprep.subr.mxu0 0.0
        %616 = vmatpush1.xpose.msra.mxu0 %v582
        %617 = vmatprep.subr.mxu0 0.0
        %618 = vmatpush1.xpose.msra.mxu0 %v583
        %619 = vmatprep.subr.mxu0 0.0
        %620 = vmatpush1.xpose.msra.mxu0 %v584
        %621 = vmatprep.subr.mxu0 0.0
        %622 = vmatpush1.xpose.msra.mxu0 %v585
        %623 = vmatprep.subr.mxu0 0.0
        %624 = vmatpush1.xpose.msra.mxu0 %v586
        %625 = vmatprep.subr.mxu0 0.0
        %626 = vmatpush1.xpose.msra.mxu0 %v587
        %627 = vmatprep.subr.mxu0 0.0
        %628 = vmatpush1.xpose.msra.mxu0 0.0
        %629 = vmatprep.subr.mxu0 0.0
        %630 = vmatpush1.xpose.msra.mxu0 0.0
        %631 = vmatprep.subr.mxu0 0.0
        %632 = vmatpush1.xpose.msra.mxu0 0.0
        %633 = vmatprep.subr.mxu0 0.0
        %634 = vmatpush1.xpose.msra.mxu0 0.0
        %635 = vmatprep.subr.mxu0 0.0
        %636 = vmatpush1.xpose.msra.mxu0 0.0
        %637 = vmatprep.subr.mxu0 0.0
        %638 = vmatpush1.xpose.msra.mxu0 0.0
        %639 = vmatprep.subr.mxu0 0.0
        %640 = vmatpush1.xpose.msra.mxu0 0.0
        %641 = vmatprep.subr.mxu0 0.0
        %642 = vmatpush1.xpose.msra.mxu0 0.0
        %643 = vmatprep.subr.mxu0 0.0
        %644 = vmatpush1.xpose.msra.mxu0 0.0
        %645 = vmatprep.subr.mxu0 0.0
        %646 = vmatpush1.xpose.msra.mxu0 0.0
        %647 = vmatprep.subr.mxu0 0.0
        %648 = vmatpush1.xpose.msra.mxu0 0.0
        %649 = vmatprep.subr.mxu0 0.0
        %650 = vmatpush1.xpose.msra.mxu0 0.0
        %651 = vmatprep.subr.mxu0 0.0
        %652 = vmatpush1.xpose.msra.mxu0 0.0
        %653 = vmatprep.subr.mxu0 0.0
        %654 = vmatpush1.xpose.msra.mxu0 0.0
        %655 = vmatprep.subr.mxu0 0.0
        %656 = vmatpush1.xpose.msra.mxu0 0.0
        %657 = vmatprep.subr.mxu0 0.0
        %658 = vmatpush1.xpose.msra.mxu0 0.0
        %659 = vmatprep.mubr.f32.mxu0 0.0
        %660 = vmatmul.mubr.f32.gmra.mrb[0].mxu0 %v476
        %v661 = vpop.f32.mrb[0].mxu0
        %v662 = vadd.f32 %v593, %v661
        %v663 = vpop.f32.mrb[0].mxu0
        %664 = vmatprep.mubr.f32.mxu0 0.0
        %665 = vmatmul.mubr.f32.gmra.mrb[0].mxu0 %v477
        %v666 = vpop.f32.mrb[0].mxu0
        %v667 = vadd.f32 %v593, %v666
        %v668 = vpop.f32.mrb[0].mxu0
        %669 = vmatprep.mubr.f32.mxu0 0.0
        %670 = vmatmul.mubr.f32.gmra.mrb[0].mxu0 %v478
        %v671 = vpop.f32.mrb[0].mxu0
        %v672 = vadd.f32 %v593, %v671
        %v673 = vpop.f32.mrb[0].mxu0
        %674 = vmatprep.mubr.f32.mxu0 0.0
        %675 = vmatmul.mubr.f32.gmra.mrb[0].mxu0 %v479
        %v676 = vpop.f32.mrb[0].mxu0
        %v677 = vadd.f32 %v593, %v676
        %v678 = vpop.f32.mrb[0].mxu0
        %679 = vmatprep.mubr.f32.mxu0 0.0
        %680 = vmatmul.mubr.f32.gmra.mrb[0].mxu0 %v480
        %v681 = vpop.f32.mrb[0].mxu0
        %v682 = vadd.f32 %v593, %v681
        %v683 = vpop.f32.mrb[0].mxu0
        %684 = vmatprep.mubr.f32.mxu0 0.0
        %685 = vmatmul.mubr.f32.gmra.mrb[0].mxu0 %v481
        %v686 = vpop.f32.mrb[0].mxu0
        %v687 = vadd.f32 %v593, %v686
        %v688 = vpop.f32.mrb[0].mxu0
        %689 = vmatprep.mubr.f32.mxu0 0.0
        %690 = vmatmul.mubr.f32.gmra.mrb[0].mxu0 %v482
        %v691 = vpop.f32.mrb[0].mxu0
        %v692 = vadd.f32 %v593, %v691
        %v693 = vpop.f32.mrb[0].mxu0
        %694 = vmatprep.mubr.f32.mxu0 0.0
        %695 = vmatmul.mubr.f32.gmra.mrb[0].mxu0 %v483
        %v696 = vpop.f32.mrb[0].mxu0
        %v697 = vadd.f32 %v593, %v696
        %v698 = vpop.f32.mrb[0].mxu0
        %699 = vmatprep.mubr.f32.mxu0 0.0
        %700 = vmatmul.mubr.f32.gmra.mrb[0].mxu0 %v484
        %v701 = vpop.f32.mrb[0].mxu0
        %v702 = vadd.f32 %v593, %v701
        %v703 = vpop.f32.mrb[0].mxu0
        %704 = vmatprep.mubr.f32.mxu0 0.0
        %705 = vmatmul.mubr.f32.gmra.mrb[0].mxu0 %v485
        %v706 = vpop.f32.mrb[0].mxu0
        %v707 = vadd.f32 %v593, %v706
        %v708 = vpop.f32.mrb[0].mxu0
        %709 = vmatprep.mubr.f32.mxu0 0.0
        %710 = vmatmul.mubr.f32.gmra.mrb[0].mxu0 %v486
        %v711 = vpop.f32.mrb[0].mxu0
        %v712 = vadd.f32 %v593, %v711
        %v713 = vpop.f32.mrb[0].mxu0
        %714 = vmatprep.mubr.f32.mxu0 0.0
        %715 = vmatmul.mubr.f32.gmra.mrb[0].mxu0 %v487
        %v716 = vpop.f32.mrb[0].mxu0
        %v717 = vadd.f32 %v593, %v716
        %v718 = vpop.f32.mrb[0].mxu0
        %719 = vmatprep.mubr.f32.mxu0 0.0
        %720 = vmatmul.mubr.f32.gmra.mrb[0].mxu0 %v488
        %v721 = vpop.f32.mrb[0].mxu0
        %v722 = vadd.f32 %v593, %v721
        %v723 = vpop.f32.mrb[0].mxu0
        %724 = vmatprep.mubr.f32.mxu0 0.0
        %725 = vmatmul.mubr.f32.gmra.mrb[0].mxu0 %v489
        %v726 = vpop.f32.mrb[0].mxu0
        %v727 = vadd.f32 %v593, %v726
        %v728 = vpop.f32.mrb[0].mxu0
        %729 = vmatprep.mubr.f32.mxu0 0.0
        %730 = vmatmul.mubr.f32.gmra.mrb[0].mxu0 %v490
        %v731 = vpop.f32.mrb[0].mxu0
        %v732 = vadd.f32 %v593, %v731
        %v733 = vpop.f32.mrb[0].mxu0
        %734 = vmatprep.mubr.f32.mxu0 0.0
        %735 = vmatmul.mubr.f32.gmra.mrb[0].mxu0 %v491
        %v736 = vpop.f32.mrb[0].mxu0
        %v737 = vadd.f32 %v593, %v736
        %v738 = vpop.f32.mrb[0].mxu0
        %739 = vmatprep.mubr.f32.mxu0 0.0
        %740 = vmatmul.mubr.f32.gmra.mrb[0].mxu0 %v492
        %v741 = vpop.f32.mrb[0].mxu0
        %v742 = vadd.f32 %v593, %v741
        %v743 = vpop.f32.mrb[0].mxu0
        %744 = vmatprep.mubr.f32.mxu0 0.0
        %745 = vmatmul.mubr.f32.gmra.mrb[0].mxu0 %v493
        %v746 = vpop.f32.mrb[0].mxu0
        %v747 = vadd.f32 %v593, %v746
        %v748 = vpop.f32.mrb[0].mxu0
        %749 = vmatprep.mubr.f32.mxu0 0.0
        %750 = vmatmul.mubr.f32.gmra.mrb[0].mxu0 %v494
        %v751 = vpop.f32.mrb[0].mxu0
        %v752 = vadd.f32 %v593, %v751
        %v753 = vpop.f32.mrb[0].mxu0
        %754 = vmatprep.mubr.f32.mxu0 0.0
        %755 = vmatmul.mubr.f32.gmra.mrb[0].mxu0 %v495
        %v756 = vpop.f32.mrb[0].mxu0
        %v757 = vadd.f32 %v593, %v756
        %v758 = vpop.f32.mrb[0].mxu0
        %759 = vmatprep.mubr.f32.mxu0 0.0
        %760 = vmatmul.mubr.f32.gmra.mrb[0].mxu0 %v496
        %v761 = vpop.f32.mrb[0].mxu0
        %v762 = vadd.f32 %v593, %v761
        %v763 = vpop.f32.mrb[0].mxu0
        %764 = vmatprep.mubr.f32.mxu0 0.0
        %765 = vmatmul.mubr.f32.gmra.mrb[0].mxu0 %v497
        %v766 = vpop.f32.mrb[0].mxu0
        %v767 = vadd.f32 %v593, %v766
        %v768 = vpop.f32.mrb[0].mxu0
        %769 = vmatprep.mubr.f32.mxu0 0.0
        %770 = vmatmul.mubr.f32.gmra.mrb[0].mxu0 %v498
        %v771 = vpop.f32.mrb[0].mxu0
        %v772 = vadd.f32 %v593, %v771
        %v773 = vpop.f32.mrb[0].mxu0
        %774 = vmatprep.mubr.f32.mxu0 0.0
        %775 = vmatmul.mubr.f32.gmra.mrb[0].mxu0 %v499
        %v776 = vpop.f32.mrb[0].mxu0
        %v777 = vadd.f32 %v593, %v776
        %v778 = vpop.f32.mrb[0].mxu0
        %779 = vmatprep.mubr.f32.mxu0 0.0
        %780 = vmatmul.mubr.f32.gmra.mrb[0].mxu0 %v500
        %v781 = vpop.f32.mrb[0].mxu0
        %v782 = vadd.f32 %v593, %v781
        %v783 = vpop.f32.mrb[0].mxu0
        %784 = vmatprep.mubr.f32.mxu0 0.0
        %785 = vmatmul.mubr.f32.gmra.mrb[0].mxu0 %v501
        %v786 = vpop.f32.mrb[0].mxu0
        %v787 = vadd.f32 %v593, %v786
        %v788 = vpop.f32.mrb[0].mxu0
        %789 = vmatprep.mubr.f32.mxu0 0.0
        %790 = vmatmul.mubr.f32.gmra.mrb[0].mxu0 %v502
        %v791 = vpop.f32.mrb[0].mxu0
        %v792 = vadd.f32 %v593, %v791
        %v793 = vpop.f32.mrb[0].mxu0
        %794 = vmatprep.mubr.f32.mxu0 0.0
        %795 = vmatmul.mubr.f32.gmra.mrb[0].mxu0 %v503
        %v796 = vpop.f32.mrb[0].mxu0
        %v797 = vadd.f32 %v593, %v796
        %v798 = vpop.f32.mrb[0].mxu0
        %799 = vmatprep.mubr.f32.mxu0 0.0
        %800 = vmatmul.mubr.f32.gmra.mrb[0].mxu0 %v504
        %v801 = vpop.f32.mrb[0].mxu0
        %v802 = vadd.f32 %v593, %v801
        %v803 = vpop.f32.mrb[0].mxu0
        %804 = vmatprep.mubr.f32.mxu0 0.0
        %805 = vmatmul.mubr.f32.gmra.mrb[0].mxu0 %v505
        %v806 = vpop.f32.mrb[0].mxu0
        %v807 = vadd.f32 %v593, %v806
        %v808 = vpop.f32.mrb[0].mxu0
        %809 = vmatprep.mubr.f32.mxu0 0.0
        %810 = vmatmul.mubr.f32.gmra.mrb[0].mxu0 %v506
        %v811 = vpop.f32.mrb[0].mxu0
        %v812 = vadd.f32 %v593, %v811
        %v813 = vpop.f32.mrb[0].mxu0
        %814 = vmatprep.mubr.f32.mxu0 0.0
        %815 = vmatmul.mubr.f32.gmra.mrb[0].mxu0 %v507
        %v816 = vpop.f32.mrb[0].mxu0
        %v817 = vadd.f32 %v593, %v816
        %v818 = vpop.f32.mrb[0].mxu0
        %819 = vdwg.mxu0
        %v820 = vadd.f32 %v662, %v508
        %v821 = vadd.f32 %v667, %v509
        %v822 = vadd.f32 %v672, %v510
        %v823 = vadd.f32 %v677, %v511
        %v824 = vadd.f32 %v682, %v512
        %v825 = vadd.f32 %v687, %v513
        %v826 = vadd.f32 %v692, %v514
        %v827 = vadd.f32 %v697, %v515
        %v828 = vadd.f32 %v702, %v516
        %v829 = vadd.f32 %v707, %v517
        %v830 = vadd.f32 %v712, %v518
        %v831 = vadd.f32 %v717, %v519
        %v832 = vadd.f32 %v722, %v520
        %v833 = vadd.f32 %v727, %v521
        %v834 = vadd.f32 %v732, %v522
        %v835 = vadd.f32 %v737, %v523
        %v836 = vadd.f32 %v742, %v524
        %v837 = vadd.f32 %v747, %v525
        %v838 = vadd.f32 %v752, %v526
        %v839 = vadd.f32 %v757, %v527
        %v840 = vadd.f32 %v762, %v528
        %v841 = vadd.f32 %v767, %v529
        %v842 = vadd.f32 %v772, %v530
        %v843 = vadd.f32 %v777, %v531
        %v844 = vadd.f32 %v782, %v532
        %v845 = vadd.f32 %v787, %v533
        %v846 = vadd.f32 %v792, %v534
        %v847 = vadd.f32 %v797, %v535
        %v848 = vadd.f32 %v802, %v536
        %v849 = vadd.f32 %v807, %v537
        %v850 = vadd.f32 %v812, %v538
        %v851 = vadd.f32 %v817, %v539
        %v852 = vld [vmem:[#allocation10] sm:$0xff]
        %v853 = vld [vmem:[#allocation10 + $0x8] sm:$0xff]
        %v854 = vld [vmem:[#allocation10 + $0x10] sm:$0xff]
        %v855 = vld [vmem:[#allocation10 + $0x18] sm:$0xff]
        %v856 = vld [vmem:[#allocation10 + $0x20] sm:$0xff]
        %v857 = vld [vmem:[#allocation10 + $0x28] sm:$0xff]
        %v858 = vld [vmem:[#allocation10 + $0x30] sm:$0xff]
        %v859 = vld [vmem:[#allocation10 + $0x38] sm:$0xff]
        %v860 = vld [vmem:[#allocation10 + $0x40] sm:$0xff]
        %v861 = vld [vmem:[#allocation10 + $0x48] sm:$0xff]
        %v862 = vld [vmem:[#allocation10 + $0x50] sm:$0xff]
        %v863 = vld [vmem:[#allocation10 + $0x58] sm:$0xff]
        %v864 = vld [vmem:[#allocation10 + $0x60] sm:$0xff]
        %v865 = vld [vmem:[#allocation10 + $0x68] sm:$0xff]
        %v866 = vld [vmem:[#allocation10 + $0x70] sm:$0xff]
        %v867 = vld [vmem:[#allocation10 + $0x78] sm:$0xff]
        %v868 = vld [vmem:[%s6] sm:$0x1]
        %v870 = vlaneseq
        %v871 = vshrl.u32 %v870, 7
        %v872 = vsub.s32 0, %v871
        %v873 = vrot.slane %v868, %v872
        %875 = vmatprep.subr.mxu0 0.0
        %876 = vmatpush1.xpose.msra.mxu0 %v852
        %877 = vmatprep.subr.mxu0 0.0
        %878 = vmatpush1.xpose.msra.mxu0 %v853
        %879 = vmatprep.subr.mxu0 0.0
        %880 = vmatpush1.xpose.msra.mxu0 %v854
        %881 = vmatprep.subr.mxu0 0.0
        %882 = vmatpush1.xpose.msra.mxu0 %v855
        %883 = vmatprep.subr.mxu0 0.0
        %884 = vmatpush1.xpose.msra.mxu0 %v856
        %885 = vmatprep.subr.mxu0 0.0
        %886 = vmatpush1.xpose.msra.mxu0 %v857
        %887 = vmatprep.subr.mxu0 0.0
        %888 = vmatpush1.xpose.msra.mxu0 %v858
        %889 = vmatprep.subr.mxu0 0.0
        %890 = vmatpush1.xpose.msra.mxu0 %v859
        %891 = vmatprep.subr.mxu0 0.0
        %892 = vmatpush1.xpose.msra.mxu0 %v860
        %893 = vmatprep.subr.mxu0 0.0
        %894 = vmatpush1.xpose.msra.mxu0 %v861
        %895 = vmatprep.subr.mxu0 0.0
        %896 = vmatpush1.xpose.msra.mxu0 %v862
        %897 = vmatprep.subr.mxu0 0.0
        %898 = vmatpush1.xpose.msra.mxu0 %v863
        %899 = vmatprep.subr.mxu0 0.0
        %900 = vmatpush1.xpose.msra.mxu0 %v864
        %901 = vmatprep.subr.mxu0 0.0
        %902 = vmatpush1.xpose.msra.mxu0 %v865
        %903 = vmatprep.subr.mxu0 0.0
        %904 = vmatpush1.xpose.msra.mxu0 %v866
        %905 = vmatprep.subr.mxu0 0.0
        %906 = vmatpush1.xpose.msra.mxu0 %v867
        %907 = vmatprep.subr.mxu0 0.0
        %908 = vmatpush1.xpose.msra.mxu0 0.0
        %909 = vmatprep.subr.mxu0 0.0
        %910 = vmatpush1.xpose.msra.mxu0 0.0
        %911 = vmatprep.subr.mxu0 0.0
        %912 = vmatpush1.xpose.msra.mxu0 0.0
        %913 = vmatprep.subr.mxu0 0.0
        %914 = vmatpush1.xpose.msra.mxu0 0.0
        %915 = vmatprep.subr.mxu0 0.0
        %916 = vmatpush1.xpose.msra.mxu0 0.0
        %917 = vmatprep.subr.mxu0 0.0
        %918 = vmatpush1.xpose.msra.mxu0 0.0
        %919 = vmatprep.subr.mxu0 0.0
        %920 = vmatpush1.xpose.msra.mxu0 0.0
        %921 = vmatprep.subr.mxu0 0.0
        %922 = vmatpush1.xpose.msra.mxu0 0.0
        %923 = vmatprep.subr.mxu0 0.0
        %924 = vmatpush1.xpose.msra.mxu0 0.0
        %925 = vmatprep.subr.mxu0 0.0
        %926 = vmatpush1.xpose.msra.mxu0 0.0
        %927 = vmatprep.subr.mxu0 0.0
        %928 = vmatpush1.xpose.msra.mxu0 0.0
        %929 = vmatprep.subr.mxu0 0.0
        %930 = vmatpush1.xpose.msra.mxu0 0.0
        %931 = vmatprep.subr.mxu0 0.0
        %932 = vmatpush1.xpose.msra.mxu0 0.0
        %933 = vmatprep.subr.mxu0 0.0
        %934 = vmatpush1.xpose.msra.mxu0 0.0
        %935 = vmatprep.subr.mxu0 0.0
        %936 = vmatpush1.xpose.msra.mxu0 0.0
        %937 = vmatprep.subr.mxu0 0.0
        %938 = vmatpush1.xpose.msra.mxu0 0.0
        %939 = vmatprep.mubr.f32.mxu0 0.0
        %940 = vmatmul.mubr.f32.gmra.mrb[0].mxu0 %v820
        %v941 = vpop.f32.mrb[0].mxu0
        %v942 = vadd.f32 %v873, %v941
        %v943 = vpop.f32.mrb[0].mxu0
        %944 = vmatprep.mubr.f32.mxu0 0.0
        %945 = vmatmul.mubr.f32.gmra.mrb[0].mxu0 %v821
        %v946 = vpop.f32.mrb[0].mxu0
        %v947 = vadd.f32 %v873, %v946
        %v948 = vpop.f32.mrb[0].mxu0
        %949 = vmatprep.mubr.f32.mxu0 0.0
        %950 = vmatmul.mubr.f32.gmra.mrb[0].mxu0 %v822
        %v951 = vpop.f32.mrb[0].mxu0
        %v952 = vadd.f32 %v873, %v951
        %v953 = vpop.f32.mrb[0].mxu0
        %954 = vmatprep.mubr.f32.mxu0 0.0
        %955 = vmatmul.mubr.f32.gmra.mrb[0].mxu0 %v823
        %v956 = vpop.f32.mrb[0].mxu0
        %v957 = vadd.f32 %v873, %v956
        %v958 = vpop.f32.mrb[0].mxu0
        %959 = vmatprep.mubr.f32.mxu0 0.0
        %960 = vmatmul.mubr.f32.gmra.mrb[0].mxu0 %v824
        %v961 = vpop.f32.mrb[0].mxu0
        %v962 = vadd.f32 %v873, %v961
        %v963 = vpop.f32.mrb[0].mxu0
        %964 = vmatprep.mubr.f32.mxu0 0.0
        %965 = vmatmul.mubr.f32.gmra.mrb[0].mxu0 %v825
        %v966 = vpop.f32.mrb[0].mxu0
        %v967 = vadd.f32 %v873, %v966
        %v968 = vpop.f32.mrb[0].mxu0
        %969 = vmatprep.mubr.f32.mxu0 0.0
        %970 = vmatmul.mubr.f32.gmra.mrb[0].mxu0 %v826
        %v971 = vpop.f32.mrb[0].mxu0
        %v972 = vadd.f32 %v873, %v971
        %v973 = vpop.f32.mrb[0].mxu0
        %974 = vmatprep.mubr.f32.mxu0 0.0
        %975 = vmatmul.mubr.f32.gmra.mrb[0].mxu0 %v827
        %v976 = vpop.f32.mrb[0].mxu0
        %v977 = vadd.f32 %v873, %v976
        %v978 = vpop.f32.mrb[0].mxu0
        %979 = vmatprep.mubr.f32.mxu0 0.0
        %980 = vmatmul.mubr.f32.gmra.mrb[0].mxu0 %v828
        %v981 = vpop.f32.mrb[0].mxu0
        %v982 = vadd.f32 %v873, %v981
        %v983 = vpop.f32.mrb[0].mxu0
        %984 = vmatprep.mubr.f32.mxu0 0.0
        %985 = vmatmul.mubr.f32.gmra.mrb[0].mxu0 %v829
        %v986 = vpop.f32.mrb[0].mxu0
        %v987 = vadd.f32 %v873, %v986
        %v988 = vpop.f32.mrb[0].mxu0
        %989 = vmatprep.mubr.f32.mxu0 0.0
        %990 = vmatmul.mubr.f32.gmra.mrb[0].mxu0 %v830
        %v991 = vpop.f32.mrb[0].mxu0
        %v992 = vadd.f32 %v873, %v991
        %v993 = vpop.f32.mrb[0].mxu0
        %994 = vmatprep.mubr.f32.mxu0 0.0
        %995 = vmatmul.mubr.f32.gmra.mrb[0].mxu0 %v831
        %v996 = vpop.f32.mrb[0].mxu0
        %v997 = vadd.f32 %v873, %v996
        %v998 = vpop.f32.mrb[0].mxu0
        %999 = vmatprep.mubr.f32.mxu0 0.0
        %1000 = vmatmul.mubr.f32.gmra.mrb[0].mxu0 %v832
        %v1001 = vpop.f32.mrb[0].mxu0
        %v1002 = vadd.f32 %v873, %v1001
        %v1003 = vpop.f32.mrb[0].mxu0
        %1004 = vmatprep.mubr.f32.mxu0 0.0
        %1005 = vmatmul.mubr.f32.gmra.mrb[0].mxu0 %v833
        %v1006 = vpop.f32.mrb[0].mxu0
        %v1007 = vadd.f32 %v873, %v1006
        %v1008 = vpop.f32.mrb[0].mxu0
        %1009 = vmatprep.mubr.f32.mxu0 0.0
        %1010 = vmatmul.mubr.f32.gmra.mrb[0].mxu0 %v834
        %v1011 = vpop.f32.mrb[0].mxu0
        %v1012 = vadd.f32 %v873, %v1011
        %v1013 = vpop.f32.mrb[0].mxu0
        %1014 = vmatprep.mubr.f32.mxu0 0.0
        %1015 = vmatmul.mubr.f32.gmra.mrb[0].mxu0 %v835
        %v1016 = vpop.f32.mrb[0].mxu0
        %v1017 = vadd.f32 %v873, %v1016
        %v1018 = vpop.f32.mrb[0].mxu0
        %1019 = vmatprep.mubr.f32.mxu0 0.0
        %1020 = vmatmul.mubr.f32.gmra.mrb[0].mxu0 %v836
        %v1021 = vpop.f32.mrb[0].mxu0
        %v1022 = vadd.f32 %v873, %v1021
        %v1023 = vpop.f32.mrb[0].mxu0
        %1024 = vmatprep.mubr.f32.mxu0 0.0
        %1025 = vmatmul.mubr.f32.gmra.mrb[0].mxu0 %v837
        %v1026 = vpop.f32.mrb[0].mxu0
        %v1027 = vadd.f32 %v873, %v1026
        %v1028 = vpop.f32.mrb[0].mxu0
        %1029 = vmatprep.mubr.f32.mxu0 0.0
        %1030 = vmatmul.mubr.f32.gmra.mrb[0].mxu0 %v838
        %v1031 = vpop.f32.mrb[0].mxu0
        %v1032 = vadd.f32 %v873, %v1031
        %v1033 = vpop.f32.mrb[0].mxu0
        %1034 = vmatprep.mubr.f32.mxu0 0.0
        %1035 = vmatmul.mubr.f32.gmra.mrb[0].mxu0 %v839
        %v1036 = vpop.f32.mrb[0].mxu0
        %v1037 = vadd.f32 %v873, %v1036
        %v1038 = vpop.f32.mrb[0].mxu0
        %1039 = vmatprep.mubr.f32.mxu0 0.0
        %1040 = vmatmul.mubr.f32.gmra.mrb[0].mxu0 %v840
        %v1041 = vpop.f32.mrb[0].mxu0
        %v1042 = vadd.f32 %v873, %v1041
        %v1043 = vpop.f32.mrb[0].mxu0
        %1044 = vmatprep.mubr.f32.mxu0 0.0
        %1045 = vmatmul.mubr.f32.gmra.mrb[0].mxu0 %v841
        %v1046 = vpop.f32.mrb[0].mxu0
        %v1047 = vadd.f32 %v873, %v1046
        %v1048 = vpop.f32.mrb[0].mxu0
        %1049 = vmatprep.mubr.f32.mxu0 0.0
        %1050 = vmatmul.mubr.f32.gmra.mrb[0].mxu0 %v842
        %v1051 = vpop.f32.mrb[0].mxu0
        %v1052 = vadd.f32 %v873, %v1051
        %v1053 = vpop.f32.mrb[0].mxu0
        %1054 = vmatprep.mubr.f32.mxu0 0.0
        %1055 = vmatmul.mubr.f32.gmra.mrb[0].mxu0 %v843
        %v1056 = vpop.f32.mrb[0].mxu0
        %v1057 = vadd.f32 %v873, %v1056
        %v1058 = vpop.f32.mrb[0].mxu0
        %1059 = vmatprep.mubr.f32.mxu0 0.0
        %1060 = vmatmul.mubr.f32.gmra.mrb[0].mxu0 %v844
        %v1061 = vpop.f32.mrb[0].mxu0
        %v1062 = vadd.f32 %v873, %v1061
        %v1063 = vpop.f32.mrb[0].mxu0
        %1064 = vmatprep.mubr.f32.mxu0 0.0
        %1065 = vmatmul.mubr.f32.gmra.mrb[0].mxu0 %v845
        %v1066 = vpop.f32.mrb[0].mxu0
        %v1067 = vadd.f32 %v873, %v1066
        %v1068 = vpop.f32.mrb[0].mxu0
        %1069 = vmatprep.mubr.f32.mxu0 0.0
        %1070 = vmatmul.mubr.f32.gmra.mrb[0].mxu0 %v846
        %v1071 = vpop.f32.mrb[0].mxu0
        %v1072 = vadd.f32 %v873, %v1071
        %v1073 = vpop.f32.mrb[0].mxu0
        %1074 = vmatprep.mubr.f32.mxu0 0.0
        %1075 = vmatmul.mubr.f32.gmra.mrb[0].mxu0 %v847
        %v1076 = vpop.f32.mrb[0].mxu0
        %v1077 = vadd.f32 %v873, %v1076
        %v1078 = vpop.f32.mrb[0].mxu0
        %1079 = vmatprep.mubr.f32.mxu0 0.0
        %1080 = vmatmul.mubr.f32.gmra.mrb[0].mxu0 %v848
        %v1081 = vpop.f32.mrb[0].mxu0
        %v1082 = vadd.f32 %v873, %v1081
        %v1083 = vpop.f32.mrb[0].mxu0
        %1084 = vmatprep.mubr.f32.mxu0 0.0
        %1085 = vmatmul.mubr.f32.gmra.mrb[0].mxu0 %v849
        %v1086 = vpop.f32.mrb[0].mxu0
        %v1087 = vadd.f32 %v873, %v1086
        %v1088 = vpop.f32.mrb[0].mxu0
        %1089 = vmatprep.mubr.f32.mxu0 0.0
        %1090 = vmatmul.mubr.f32.gmra.mrb[0].mxu0 %v850
        %v1091 = vpop.f32.mrb[0].mxu0
        %v1092 = vadd.f32 %v873, %v1091
        %v1093 = vpop.f32.mrb[0].mxu0
        %1094 = vmatprep.mubr.f32.mxu0 0.0
        %1095 = vmatmul.mubr.f32.gmra.mrb[0].mxu0 %v851
        %v1096 = vpop.f32.mrb[0].mxu0
        %v1097 = vadd.f32 %v873, %v1096
        %v1098 = vpop.f32.mrb[0].mxu0
        %1099 = vdwg.mxu0
        %v1100 = vadd.f32 %v942, %v540
        %v1101 = vadd.f32 %v947, %v541
        %v1102 = vadd.f32 %v952, %v542
        %v1103 = vadd.f32 %v957, %v543
        %v1104 = vadd.f32 %v962, %v544
        %v1105 = vadd.f32 %v967, %v545
        %v1106 = vadd.f32 %v972, %v546
        %v1107 = vadd.f32 %v977, %v547
        %v1108 = vadd.f32 %v982, %v548
        %v1109 = vadd.f32 %v987, %v549
        %v1110 = vadd.f32 %v992, %v550
        %v1111 = vadd.f32 %v997, %v551
        %v1112 = vadd.f32 %v1002, %v552
        %v1113 = vadd.f32 %v1007, %v553
        %v1114 = vadd.f32 %v1012, %v554
        %v1115 = vadd.f32 %v1017, %v555
        %v1116 = vadd.f32 %v1022, %v556
        %v1117 = vadd.f32 %v1027, %v557
        %v1118 = vadd.f32 %v1032, %v558
        %v1119 = vadd.f32 %v1037, %v559
        %v1120 = vadd.f32 %v1042, %v560
        %v1121 = vadd.f32 %v1047, %v561
        %v1122 = vadd.f32 %v1052, %v562
        %v1123 = vadd.f32 %v1057, %v563
        %v1124 = vadd.f32 %v1062, %v564
        %v1125 = vadd.f32 %v1067, %v565
        %v1126 = vadd.f32 %v1072, %v566
        %v1127 = vadd.f32 %v1077, %v567
        %v1128 = vadd.f32 %v1082, %v568
        %v1129 = vadd.f32 %v1087, %v569
        %v1130 = vadd.f32 %v1092, %v570
        %v1131 = vadd.f32 %v1097, %v571
        %v1132 = vld [vmem:[#allocation11] sm:$0xff]
        %v1133 = vld [vmem:[#allocation11 + $0x8] sm:$0xff]
        %v1134 = vld [vmem:[#allocation11 + $0x10] sm:$0xff]
        %v1135 = vld [vmem:[#allocation11 + $0x18] sm:$0xff]
        %v1136 = vld [vmem:[#allocation11 + $0x20] sm:$0xff]
        %v1137 = vld [vmem:[#allocation11 + $0x28] sm:$0xff]
        %v1138 = vld [vmem:[#allocation11 + $0x30] sm:$0xff]
        %v1139 = vld [vmem:[#allocation11 + $0x38] sm:$0xff]
        %v1140 = vld [vmem:[#allocation11 + $0x40] sm:$0xff]
        %v1141 = vld [vmem:[#allocation11 + $0x48] sm:$0xff]
        %v1142 = vld [vmem:[#allocation11 + $0x50] sm:$0xff]
        %v1143 = vld [vmem:[#allocation11 + $0x58] sm:$0xff]
        %v1144 = vld [vmem:[#allocation11 + $0x60] sm:$0xff]
        %v1145 = vld [vmem:[#allocation11 + $0x68] sm:$0xff]
        %v1146 = vld [vmem:[#allocation11 + $0x70] sm:$0xff]
        %v1147 = vld [vmem:[#allocation11 + $0x78] sm:$0xff]
        %v1148 = vld [vmem:[%s8] sm:$0x1]
        %v1150 = vlaneseq
        %v1151 = vshrl.u32 %v1150, 7
        %v1152 = vsub.s32 0, %v1151
        %v1153 = vrot.slane %v1148, %v1152
        %1155 = vmatprep.subr.mxu0 0.0
        %1156 = vmatpush1.xpose.msra.mxu0 %v1132
        %1157 = vmatprep.subr.mxu0 0.0
        %1158 = vmatpush1.xpose.msra.mxu0 %v1133
        %1159 = vmatprep.subr.mxu0 0.0
        %1160 = vmatpush1.xpose.msra.mxu0 %v1134
        %1161 = vmatprep.subr.mxu0 0.0
        %1162 = vmatpush1.xpose.msra.mxu0 %v1135
        %1163 = vmatprep.subr.mxu0 0.0
        %1164 = vmatpush1.xpose.msra.mxu0 %v1136
        %1165 = vmatprep.subr.mxu0 0.0
        %1166 = vmatpush1.xpose.msra.mxu0 %v1137
        %1167 = vmatprep.subr.mxu0 0.0
        %1168 = vmatpush1.xpose.msra.mxu0 %v1138
        %1169 = vmatprep.subr.mxu0 0.0
        %1170 = vmatpush1.xpose.msra.mxu0 %v1139
        %1171 = vmatprep.subr.mxu0 0.0
        %1172 = vmatpush1.xpose.msra.mxu0 %v1140
        %1173 = vmatprep.subr.mxu0 0.0
        %1174 = vmatpush1.xpose.msra.mxu0 %v1141
        %1175 = vmatprep.subr.mxu0 0.0
        %1176 = vmatpush1.xpose.msra.mxu0 %v1142
        %1177 = vmatprep.subr.mxu0 0.0
        %1178 = vmatpush1.xpose.msra.mxu0 %v1143
        %1179 = vmatprep.subr.mxu0 0.0
        %1180 = vmatpush1.xpose.msra.mxu0 %v1144
        %1181 = vmatprep.subr.mxu0 0.0
        %1182 = vmatpush1.xpose.msra.mxu0 %v1145
        %1183 = vmatprep.subr.mxu0 0.0
        %1184 = vmatpush1.xpose.msra.mxu0 %v1146
        %1185 = vmatprep.subr.mxu0 0.0
        %1186 = vmatpush1.xpose.msra.mxu0 %v1147
        %1187 = vmatprep.subr.mxu0 0.0
        %1188 = vmatpush1.xpose.msra.mxu0 0.0
        %1189 = vmatprep.subr.mxu0 0.0
        %1190 = vmatpush1.xpose.msra.mxu0 0.0
        %1191 = vmatprep.subr.mxu0 0.0
        %1192 = vmatpush1.xpose.msra.mxu0 0.0
        %1193 = vmatprep.subr.mxu0 0.0
        %1194 = vmatpush1.xpose.msra.mxu0 0.0
        %1195 = vmatprep.subr.mxu0 0.0
        %1196 = vmatpush1.xpose.msra.mxu0 0.0
        %1197 = vmatprep.subr.mxu0 0.0
        %1198 = vmatpush1.xpose.msra.mxu0 0.0
        %1199 = vmatprep.subr.mxu0 0.0
        %1200 = vmatpush1.xpose.msra.mxu0 0.0
        %1201 = vmatprep.subr.mxu0 0.0
        %1202 = vmatpush1.xpose.msra.mxu0 0.0
        %1203 = vmatprep.subr.mxu0 0.0
        %1204 = vmatpush1.xpose.msra.mxu0 0.0
        %1205 = vmatprep.subr.mxu0 0.0
        %1206 = vmatpush1.xpose.msra.mxu0 0.0
        %1207 = vmatprep.subr.mxu0 0.0
        %1208 = vmatpush1.xpose.msra.mxu0 0.0
        %1209 = vmatprep.subr.mxu0 0.0
        %1210 = vmatpush1.xpose.msra.mxu0 0.0
        %1211 = vmatprep.subr.mxu0 0.0
        %1212 = vmatpush1.xpose.msra.mxu0 0.0
        %1213 = vmatprep.subr.mxu0 0.0
        %1214 = vmatpush1.xpose.msra.mxu0 0.0
        %1215 = vmatprep.subr.mxu0 0.0
        %1216 = vmatpush1.xpose.msra.mxu0 0.0
        %1217 = vmatprep.subr.mxu0 0.0
        %1218 = vmatpush1.xpose.msra.mxu0 0.0
        %1219 = vmatprep.mubr.f32.mxu0 0.0
        %1220 = vmatmul.mubr.f32.gmra.mrb[0].mxu0 %v1100
        %v1221 = vpop.f32.mrb[0].mxu0
        %v1222 = vadd.f32 %v1153, %v1221
        %v1223 = vpop.f32.mrb[0].mxu0
        %1224 = vmatprep.mubr.f32.mxu0 0.0
        %1225 = vmatmul.mubr.f32.gmra.mrb[0].mxu0 %v1101
        %v1226 = vpop.f32.mrb[0].mxu0
        %v1227 = vadd.f32 %v1153, %v1226
        %v1228 = vpop.f32.mrb[0].mxu0
        %1229 = vmatprep.mubr.f32.mxu0 0.0
        %1230 = vmatmul.mubr.f32.gmra.mrb[0].mxu0 %v1102
        %v1231 = vpop.f32.mrb[0].mxu0
        %v1232 = vadd.f32 %v1153, %v1231
        %v1233 = vpop.f32.mrb[0].mxu0
        %1234 = vmatprep.mubr.f32.mxu0 0.0
        %1235 = vmatmul.mubr.f32.gmra.mrb[0].mxu0 %v1103
        %v1236 = vpop.f32.mrb[0].mxu0
        %v1237 = vadd.f32 %v1153, %v1236
        %v1238 = vpop.f32.mrb[0].mxu0
        %1239 = vmatprep.mubr.f32.mxu0 0.0
        %1240 = vmatmul.mubr.f32.gmra.mrb[0].mxu0 %v1104
        %v1241 = vpop.f32.mrb[0].mxu0
        %v1242 = vadd.f32 %v1153, %v1241
        %v1243 = vpop.f32.mrb[0].mxu0
        %1244 = vmatprep.mubr.f32.mxu0 0.0
        %1245 = vmatmul.mubr.f32.gmra.mrb[0].mxu0 %v1105
        %v1246 = vpop.f32.mrb[0].mxu0
        %v1247 = vadd.f32 %v1153, %v1246
        %v1248 = vpop.f32.mrb[0].mxu0
        %1249 = vmatprep.mubr.f32.mxu0 0.0
        %1250 = vmatmul.mubr.f32.gmra.mrb[0].mxu0 %v1106
        %v1251 = vpop.f32.mrb[0].mxu0
        %v1252 = vadd.f32 %v1153, %v1251
        %v1253 = vpop.f32.mrb[0].mxu0
        %1254 = vmatprep.mubr.f32.mxu0 0.0
        %1255 = vmatmul.mubr.f32.gmra.mrb[0].mxu0 %v1107
        %v1256 = vpop.f32.mrb[0].mxu0
        %v1257 = vadd.f32 %v1153, %v1256
        %v1258 = vpop.f32.mrb[0].mxu0
        %1259 = vmatprep.mubr.f32.mxu0 0.0
        %1260 = vmatmul.mubr.f32.gmra.mrb[0].mxu0 %v1108
        %v1261 = vpop.f32.mrb[0].mxu0
        %v1262 = vadd.f32 %v1153, %v1261
        %v1263 = vpop.f32.mrb[0].mxu0
        %1264 = vmatprep.mubr.f32.mxu0 0.0
        %1265 = vmatmul.mubr.f32.gmra.mrb[0].mxu0 %v1109
        %v1266 = vpop.f32.mrb[0].mxu0
        %v1267 = vadd.f32 %v1153, %v1266
        %v1268 = vpop.f32.mrb[0].mxu0
        %1269 = vmatprep.mubr.f32.mxu0 0.0
        %1270 = vmatmul.mubr.f32.gmra.mrb[0].mxu0 %v1110
        %v1271 = vpop.f32.mrb[0].mxu0
        %v1272 = vadd.f32 %v1153, %v1271
        %v1273 = vpop.f32.mrb[0].mxu0
        %1274 = vmatprep.mubr.f32.mxu0 0.0
        %1275 = vmatmul.mubr.f32.gmra.mrb[0].mxu0 %v1111
        %v1276 = vpop.f32.mrb[0].mxu0
        %v1277 = vadd.f32 %v1153, %v1276
        %v1278 = vpop.f32.mrb[0].mxu0
        %1279 = vmatprep.mubr.f32.mxu0 0.0
        %1280 = vmatmul.mubr.f32.gmra.mrb[0].mxu0 %v1112
        %v1281 = vpop.f32.mrb[0].mxu0
        %v1282 = vadd.f32 %v1153, %v1281
        %v1283 = vpop.f32.mrb[0].mxu0
        %1284 = vmatprep.mubr.f32.mxu0 0.0
        %1285 = vmatmul.mubr.f32.gmra.mrb[0].mxu0 %v1113
        %v1286 = vpop.f32.mrb[0].mxu0
        %v1287 = vadd.f32 %v1153, %v1286
        %v1288 = vpop.f32.mrb[0].mxu0
        %1289 = vmatprep.mubr.f32.mxu0 0.0
        %1290 = vmatmul.mubr.f32.gmra.mrb[0].mxu0 %v1114
        %v1291 = vpop.f32.mrb[0].mxu0
        %v1292 = vadd.f32 %v1153, %v1291
        %v1293 = vpop.f32.mrb[0].mxu0
        %1294 = vmatprep.mubr.f32.mxu0 0.0
        %1295 = vmatmul.mubr.f32.gmra.mrb[0].mxu0 %v1115
        %v1296 = vpop.f32.mrb[0].mxu0
        %v1297 = vadd.f32 %v1153, %v1296
        %v1298 = vpop.f32.mrb[0].mxu0
        %1299 = vmatprep.mubr.f32.mxu0 0.0
        %1300 = vmatmul.mubr.f32.gmra.mrb[0].mxu0 %v1116
        %v1301 = vpop.f32.mrb[0].mxu0
        %v1302 = vadd.f32 %v1153, %v1301
        %v1303 = vpop.f32.mrb[0].mxu0
        %1304 = vmatprep.mubr.f32.mxu0 0.0
        %1305 = vmatmul.mubr.f32.gmra.mrb[0].mxu0 %v1117
        %v1306 = vpop.f32.mrb[0].mxu0
        %v1307 = vadd.f32 %v1153, %v1306
        %v1308 = vpop.f32.mrb[0].mxu0
        %1309 = vmatprep.mubr.f32.mxu0 0.0
        %1310 = vmatmul.mubr.f32.gmra.mrb[0].mxu0 %v1118
        %v1311 = vpop.f32.mrb[0].mxu0
        %v1312 = vadd.f32 %v1153, %v1311
        %v1313 = vpop.f32.mrb[0].mxu0
        %1314 = vmatprep.mubr.f32.mxu0 0.0
        %1315 = vmatmul.mubr.f32.gmra.mrb[0].mxu0 %v1119
        %v1316 = vpop.f32.mrb[0].mxu0
        %v1317 = vadd.f32 %v1153, %v1316
        %v1318 = vpop.f32.mrb[0].mxu0
        %1319 = vmatprep.mubr.f32.mxu0 0.0
        %1320 = vmatmul.mubr.f32.gmra.mrb[0].mxu0 %v1120
        %v1321 = vpop.f32.mrb[0].mxu0
        %v1322 = vadd.f32 %v1153, %v1321
        %v1323 = vpop.f32.mrb[0].mxu0
        %1324 = vmatprep.mubr.f32.mxu0 0.0
        %1325 = vmatmul.mubr.f32.gmra.mrb[0].mxu0 %v1121
        %v1326 = vpop.f32.mrb[0].mxu0
        %v1327 = vadd.f32 %v1153, %v1326
        %v1328 = vpop.f32.mrb[0].mxu0
        %1329 = vmatprep.mubr.f32.mxu0 0.0
        %1330 = vmatmul.mubr.f32.gmra.mrb[0].mxu0 %v1122
        %v1331 = vpop.f32.mrb[0].mxu0
        %v1332 = vadd.f32 %v1153, %v1331
        %v1333 = vpop.f32.mrb[0].mxu0
        %1334 = vmatprep.mubr.f32.mxu0 0.0
        %1335 = vmatmul.mubr.f32.gmra.mrb[0].mxu0 %v1123
        %v1336 = vpop.f32.mrb[0].mxu0
        %v1337 = vadd.f32 %v1153, %v1336
        %v1338 = vpop.f32.mrb[0].mxu0
        %1339 = vmatprep.mubr.f32.mxu0 0.0
        %1340 = vmatmul.mubr.f32.gmra.mrb[0].mxu0 %v1124
        %v1341 = vpop.f32.mrb[0].mxu0
        %v1342 = vadd.f32 %v1153, %v1341
        %v1343 = vpop.f32.mrb[0].mxu0
        %1344 = vmatprep.mubr.f32.mxu0 0.0
        %1345 = vmatmul.mubr.f32.gmra.mrb[0].mxu0 %v1125
        %v1346 = vpop.f32.mrb[0].mxu0
        %v1347 = vadd.f32 %v1153, %v1346
        %v1348 = vpop.f32.mrb[0].mxu0
        %1349 = vmatprep.mubr.f32.mxu0 0.0
        %1350 = vmatmul.mubr.f32.gmra.mrb[0].mxu0 %v1126
        %v1351 = vpop.f32.mrb[0].mxu0
        %v1352 = vadd.f32 %v1153, %v1351
        %v1353 = vpop.f32.mrb[0].mxu0
        %1354 = vmatprep.mubr.f32.mxu0 0.0
        %1355 = vmatmul.mubr.f32.gmra.mrb[0].mxu0 %v1127
        %v1356 = vpop.f32.mrb[0].mxu0
        %v1357 = vadd.f32 %v1153, %v1356
        %v1358 = vpop.f32.mrb[0].mxu0
        %1359 = vmatprep.mubr.f32.mxu0 0.0
        %1360 = vmatmul.mubr.f32.gmra.mrb[0].mxu0 %v1128
        %v1361 = vpop.f32.mrb[0].mxu0
        %v1362 = vadd.f32 %v1153, %v1361
        %v1363 = vpop.f32.mrb[0].mxu0
        %1364 = vmatprep.mubr.f32.mxu0 0.0
        %1365 = vmatmul.mubr.f32.gmra.mrb[0].mxu0 %v1129
        %v1366 = vpop.f32.mrb[0].mxu0
        %v1367 = vadd.f32 %v1153, %v1366
        %v1368 = vpop.f32.mrb[0].mxu0
        %1369 = vmatprep.mubr.f32.mxu0 0.0
        %1370 = vmatmul.mubr.f32.gmra.mrb[0].mxu0 %v1130
        %v1371 = vpop.f32.mrb[0].mxu0
        %v1372 = vadd.f32 %v1153, %v1371
        %v1373 = vpop.f32.mrb[0].mxu0
        %1374 = vmatprep.mubr.f32.mxu0 0.0
        %1375 = vmatmul.mubr.f32.gmra.mrb[0].mxu0 %v1131
        %v1376 = vpop.f32.mrb[0].mxu0
        %v1377 = vadd.f32 %v1153, %v1376
        %v1378 = vpop.f32.mrb[0].mxu0
        %1379 = vdwg.mxu0
        %1380 = vst [vmem:[%s471] sm:$0xff] %v1222
        %1381 = vst [vmem:[%s471 + $0x8] sm:$0xff] %v1227
        %1382 = vst [vmem:[%s471 + $0x10] sm:$0xff] %v1232
        %1383 = vst [vmem:[%s471 + $0x18] sm:$0xff] %v1237
        %1384 = vst [vmem:[%s471 + $0x20] sm:$0xff] %v1242
        %1385 = vst [vmem:[%s471 + $0x28] sm:$0xff] %v1247
        %1386 = vst [vmem:[%s471 + $0x30] sm:$0xff] %v1252
        %1387 = vst [vmem:[%s471 + $0x38] sm:$0xff] %v1257
        %1388 = vst [vmem:[%s471 + $0x40] sm:$0xff] %v1262
        %1389 = vst [vmem:[%s471 + $0x48] sm:$0xff] %v1267
        %1390 = vst [vmem:[%s471 + $0x50] sm:$0xff] %v1272
        %1391 = vst [vmem:[%s471 + $0x58] sm:$0xff] %v1277
        %1392 = vst [vmem:[%s471 + $0x60] sm:$0xff] %v1282
        %1393 = vst [vmem:[%s471 + $0x68] sm:$0xff] %v1287
        %1394 = vst [vmem:[%s471 + $0x70] sm:$0xff] %v1292
        %1395 = vst [vmem:[%s471 + $0x78] sm:$0xff] %v1297
        %1396 = vst [vmem:[%s471 + $0x80] sm:$0xff] %v1302
        %1397 = vst [vmem:[%s471 + $0x88] sm:$0xff] %v1307
        %1398 = vst [vmem:[%s471 + $0x90] sm:$0xff] %v1312
        %1399 = vst [vmem:[%s471 + $0x98] sm:$0xff] %v1317
        %1400 = vst [vmem:[%s471 + $0xa0] sm:$0xff] %v1322
        %1401 = vst [vmem:[%s471 + $0xa8] sm:$0xff] %v1327
        %1402 = vst [vmem:[%s471 + $0xb0] sm:$0xff] %v1332
        %1403 = vst [vmem:[%s471 + $0xb8] sm:$0xff] %v1337
        %1404 = vst [vmem:[%s471 + $0xc0] sm:$0xff] %v1342
        %1405 = vst [vmem:[%s471 + $0xc8] sm:$0xff] %v1347
        %1406 = vst [vmem:[%s471 + $0xd0] sm:$0xff] %v1352
        %1407 = vst [vmem:[%s471 + $0xd8] sm:$0xff] %v1357
        %1408 = vst [vmem:[%s471 + $0xe0] sm:$0xff] %v1362
        %1409 = vst [vmem:[%s471 + $0xe8] sm:$0xff] %v1367
        %1410 = vst [vmem:[%s471 + $0xf0] sm:$0xff] %v1372
        %1411 = vst [vmem:[%s471 + $0xf8] sm:$0xff] %v1377
        %s1412 = sand.u32 %s243, 1
        %s1413 = scalar_lea.sflag [#allocation4], %s1412
        %s1414 = sand.u32 %s243, 1
        %s1415 = smul.addr %s1414, 256
        %s1416 = scalar_lea.vmem [#allocation13], %s1415
        // Predicated region
        $region81: #{tpu_custom_call.1} parent=55 // pred_check
          %p1417 = pneg %p253
        $region82: #{tpu_custom_call.1} parent=55 // pred_check_branch
          %1419 = sbr.rel (%p1417) target = $region84
        $region83: #{tpu_custom_call.1} parent=55 // pred_region
          %s1420 = smul.u32 32, %s31
          %s1422 = ssub.s32 4096, 4096
          %1423 = vsyncadd %s1413, %s1422
          %s1424 = smul.addr %s1420, 128
          %s1425 = scalar_lea.hbm %s9, %s1424
          %s1426 = sshll.u32 %s1416, 4
          %s1427 = int_to_ptr.vmem [resolvable:$true] %s1426
          %1432 = dma.vmem_to_hbm [thread:$0]  %s1427, 4096, %s1425, %s1413, 128, 128, 8
        $region84: #{tpu_custom_call.1} parent=55 // pred_fallthru
          _
      $region56: #{tpu_custom_call.1} parent=5 // pred_fallthru
        _
      %p1433 = scmp.le.s32.totalorder 2, %s26
      // Predicated region
      $region85: #{tpu_custom_call.1} parent=5 // pred_check
        %p1434 = pneg %p1433
      $region86: #{tpu_custom_call.1} parent=5 // pred_check_branch
        %1436 = sbr.rel (%p1434) target = $region88
      $region87: #{tpu_custom_call.1} parent=5 // pred_region
        %s1437 = ssub.s32 %s26, 2
        // Predicated region
        $region89: #{tpu_custom_call.1} parent=87 // pred_check
          %p1438 = pneg %p259
        $region90: #{tpu_custom_call.1} parent=87 // pred_check_branch
          %1440 = sbr.rel (%p1438) target = $region92
        $region91: #{tpu_custom_call.1} parent=87 // pred_region
          %s1441 = sand.u32 %s244, 1
          %s1442 = scalar_lea.sflag [#allocation4], %s1441
          %s1443 = sand.u32 %s244, 1
          %s1444 = smul.addr %s1443, 256
          %s1445 = scalar_lea.vmem [#allocation13], %s1444
          %1446 = dma.done %s1442, 4096
        $region92: #{tpu_custom_call.1} parent=87 // pred_fallthru
          _
      $region88: #{tpu_custom_call.1} parent=5 // pred_fallthru
        _
    $region6: #{tpu_custom_call.1} parent=1 // loop_footer
      %s30 = sadd.s32 1, %s26
    $region7: #{tpu_custom_call.1} parent=1 // loop_footer_branch
      %25 = sbr.rel target = $region3
    $region8: #{tpu_custom_call.1} parent=1 // loop_exit
      _
    %1447 = vsyncpa [#allocation3], 1
    %s1448 = scalar_lea.sflag [#allocation3], 1
    %1449 = vsyncpa %s1448, 1
    %1450 = vsyncpa [#allocation6], 1
    %s1451 = scalar_lea.sflag [#allocation6], 1
    %1452 = vsyncpa %s1451, 1
    %1453 = vsyncpa [#allocation9], 1
    %1454 = vsyncpa [#allocation12], 1
    %1455 = vsyncpa [#allocation4], 1
    %s1456 = scalar_lea.sflag [#allocation4], 1
    %1457 = vsyncpa %s1456, 1

</llo_original>
